<compile_context>
chip_gen: v7x
topology: tpu7x:2x2x1
jax: 0.10.0
libtpu: 0.0.40
codegen_flags: <defaults>
</compile_context>

<pallas_src>
import functools

import jax
import jax.numpy as jnp
from jax.experimental import pallas as pl
from jax.experimental.pallas import tpu as pltpu

C_IN, H1, H2 = 2, 64, 128


def _delta_kernel(x_ref, w1a, w1b, b1, w2, b2, w3, b3, w4, b4,
                  wf1, bf1, wf2, bf2, wf3t, bf3, out_ref, acc_ref):
    j = pl.program_id(0)

    @pl.when(j == 0)
    def _():
        # All pooled features are post-ReLU (>= 0), so 0 is a safe max identity.
        acc_ref[...] = jnp.zeros_like(acc_ref)

    x = x_ref[...]                                            # (TN, 2) f32
    # Layer 1 (2 -> 64) on the VPU: a K=2 matmul would waste the MXU.
    h = jnp.maximum(x[:, 0:1] * w1a[...] + x[:, 1:2] * w1b[...] + b1[...], 0.0)
    # Layers 2-4 on the MXU: bf16 operands, f32 accumulation; elementwise in f32.
    h = jnp.maximum(jnp.dot(h.astype(jnp.bfloat16), w2[...],
                            preferred_element_type=jnp.float32) + b2[...], 0.0)
    h = jnp.maximum(jnp.dot(h.astype(jnp.bfloat16), w3[...],
                            preferred_element_type=jnp.float32) + b3[...], 0.0)
    h = jnp.maximum(jnp.dot(h.astype(jnp.bfloat16), w4[...],
                            preferred_element_type=jnp.float32) + b4[...], 0.0)

    # Pairwise tree max over point rows down to one (8, H2) sublane group.
    # tile_n is 8 * 2^k by construction, so every slice is sublane-aligned and
    # the VPU dependency chain is log2-depth (vs. the old serial loop).
    part = h
    while part.shape[0] > 8:
        half = part.shape[0] // 2
        part = jnp.maximum(part[:half, :], part[half:, :])
    acc_ref[...] = jnp.maximum(acc_ref[...], part)

    # Final step: finish the global max-pool and run the fc head in-kernel
    # (no pooled-feature HBM round trip, no extra per-op dispatch).
    @pl.when(j == pl.num_programs(0) - 1)
    def _():
        g = jnp.max(acc_ref[...], axis=0, keepdims=True)      # (1, H2), XLU
        g = jnp.maximum(jnp.dot(g.astype(jnp.bfloat16), wf1[...],
                                preferred_element_type=jnp.float32) + bf1[...],
                        0.0)
        g = jnp.maximum(jnp.dot(g.astype(jnp.bfloat16), wf2[...],
                                preferred_element_type=jnp.float32) + bf2[...],
                        0.0)
        # fc3 (128 -> 1) stays off the MXU: VPU multiply + cross-lane reduce.
        s = jnp.sum(g * wf3t[...], axis=-1, keepdims=True) + bf3[...]  # (1, 1)
        # Lane-dense (8, 128) broadcast output block; sigmoid on the EUP.
        out_ref[...] = jax.nn.sigmoid(jnp.broadcast_to(s, out_ref.shape))


@functools.partial(jax.jit, static_argnames=("max_tile_n",))
def delta_estimator(x, params, *, max_tile_n=2048):
    """x: (N, 2) float32 point cloud. Returns a (1, 1) sigmoid score."""
    w1, b1, w2, b2, w3, b3, w4, b4, wf1, bf1, wf2, bf2, wf3, bf3 = params
    n = x.shape[0]
    assert n % 8 == 0

    # Largest 8 * 2^k tile that divides N and respects the VMEM cap (the
    # (tile_n, 2) input block is lane-padded to 128, so it costs tile_n*512 B
    # per pipeline buffer). For N <= max_tile_n this is a single grid step.
    tile_n = 8
    while tile_n * 2 <= max_tile_n and n % (tile_n * 2) == 0:
        tile_n *= 2
    inner = n // tile_n
    # TODO(synk): for very large N on v7x, add a pltpu.CORE_PARALLEL grid axis
    # to split the point dimension across the two TensorCores.

    x = x.astype(jnp.float32)
    w1a, w1b = w1[0:1, :], w1[1:2, :]                         # (1, 64) each, f32
    weights = (w1a, w1b, b1,
               w2.astype(jnp.bfloat16), b2,
               w3.astype(jnp.bfloat16), b3,
               w4.astype(jnp.bfloat16), b4,
               wf1.astype(jnp.bfloat16), bf1,
               wf2.astype(jnp.bfloat16), bf2,
               wf3.T, bf3)                                    # fc3 weight as (1, H2)

    flops = (2 * n * (C_IN * H1 + H1 * H2 + 2 * H2 * H2)
             + 2 * (2 * H2 * H2 + H2))
    bytes_accessed = (x.size * 4
                      + (3 * H1 + 3 * H2) * 4                 # w1a/w1b/b1 + conv biases
                      + (H1 * H2 + 2 * H2 * H2) * 2           # bf16 conv weights
                      + (2 * H2 * H2) * 2                     # bf16 fc1/fc2 weights
                      + (3 * H2 + 1) * 4                      # fc biases + fc3 weight
                      + 8 * H2 * 4)                           # output block

    def rep(a):  # whole-array block, constant block index
        return pl.BlockSpec(a.shape, lambda j, nd=a.ndim: (0,) * nd)

    out = pl.pallas_call(
        _delta_kernel,
        out_shape=jax.ShapeDtypeStruct((8, H2), jnp.float32),
        grid_spec=pltpu.PrefetchScalarGridSpec(
            num_scalar_prefetch=0,
            grid=(inner,),
            in_specs=[pl.BlockSpec((tile_n, C_IN), lambda j: (j, 0))]
                     + [rep(w) for w in weights],
            out_specs=pl.BlockSpec((8, H2), lambda j: (0, 0)),
            scratch_shapes=[pltpu.VMEM((8, H2), jnp.float32)],
        ),
        compiler_params=pltpu.CompilerParams(
            dimension_semantics=("arbitrary",)),
        cost_estimate=pl.CostEstimate(flops=flops, transcendentals=H2,
                                      bytes_accessed=bytes_accessed),
    )(x, *weights)

    return out[0:1, 0:1]


def _make_params(key):
    ks = jax.random.split(key, 14)

    def wn(k, shape, scale=0.1):
        return scale * jax.random.normal(k, shape, jnp.float32)

    # PNet2D
    w1, b1 = wn(ks[0], (C_IN, H1)), wn(ks[1], (1, H1))
    w2, b2 = wn(ks[2], (H1, H2)), wn(ks[3], (1, H2))
    # PNetkD(k=128)
    w3, b3 = wn(ks[4], (H2, H2)), wn(ks[5], (1, H2))
    w4, b4 = wn(ks[6], (H2, H2)), wn(ks[7], (1, H2))
    # fc1 / fc2 / fc3
    wf1, bf1 = wn(ks[8], (H2, H2)), wn(ks[9], (1, H2))
    wf2, bf2 = wn(ks[10], (H2, H2)), wn(ks[11], (1, H2))
    wf3, bf3 = wn(ks[12], (H2, 1)), wn(ks[13], (1, 1))
    return (w1, b1, w2, b2, w3, b3, w4, b4, wf1, bf1, wf2, bf2, wf3, bf3)


def _reference(x, params):
    # Mirrors the kernel's numerics (bf16 MXU operands, f32 accumulation).
    w1, b1, w2, b2, w3, b3, w4, b4, wf1, bf1, wf2, bf2, wf3, bf3 = params
    bf16 = jnp.bfloat16
    h = jax.nn.relu(x[:, 0:1] * w1[0:1, :] + x[:, 1:2] * w1[1:2, :] + b1)
    h = jax.nn.relu(jnp.dot(h.astype(bf16), w2.astype(bf16),
                            preferred_element_type=jnp.float32) + b2)
    h = jax.nn.relu(jnp.dot(h.astype(bf16), w3.astype(bf16),
                            preferred_element_type=jnp.float32) + b3)
    h = jax.nn.relu(jnp.dot(h.astype(bf16), w4.astype(bf16),
                            preferred_element_type=jnp.float32) + b4)
    g = jnp.max(h, axis=0, keepdims=True)
    g = jax.nn.relu(jnp.dot(g.astype(bf16), wf1.astype(bf16),
                            preferred_element_type=jnp.float32) + bf1)
    g = jax.nn.relu(jnp.dot(g.astype(bf16), wf2.astype(bf16),
                            preferred_element_type=jnp.float32) + bf2)
    return jax.nn.sigmoid(g @ wf3 + bf3)


if __name__ == "__main__":
    key = jax.random.PRNGKey(0)
    k_x, k_p = jax.random.split(key)
    N = 256
    x = jax.random.normal(k_x, (N, C_IN), jnp.float32)        # N 2-D points
    params = _make_params(k_p)

    out = jax.block_until_ready(delta_estimator(x, params))
    ref = _reference(x, params)

    assert out.shape == (1, 1)
    assert jnp.allclose(out, ref, atol=5e-3, rtol=5e-3), (out, ref)

    print("KERNEL_OK")
</pallas_src>

<mosaic_0001>
module attributes {stable_mosaic.version = 11 : i64} {
  func.func @_delta_kernel(%arg0: i32, %arg1: memref<256x2xf32, #tpu.memory_space<vmem>>, %arg2: memref<1x64xf32, #tpu.memory_space<vmem>>, %arg3: memref<1x64xf32, #tpu.memory_space<vmem>>, %arg4: memref<1x64xf32, #tpu.memory_space<vmem>>, %arg5: memref<64x128xbf16, #tpu.memory_space<vmem>>, %arg6: memref<1x128xf32, #tpu.memory_space<vmem>>, %arg7: memref<128x128xbf16, #tpu.memory_space<vmem>>, %arg8: memref<1x128xf32, #tpu.memory_space<vmem>>, %arg9: memref<128x128xbf16, #tpu.memory_space<vmem>>, %arg10: memref<1x128xf32, #tpu.memory_space<vmem>>, %arg11: memref<128x128xbf16, #tpu.memory_space<vmem>>, %arg12: memref<1x128xf32, #tpu.memory_space<vmem>>, %arg13: memref<128x128xbf16, #tpu.memory_space<vmem>>, %arg14: memref<1x128xf32, #tpu.memory_space<vmem>>, %arg15: memref<1x128xf32, #tpu.memory_space<vmem>>, %arg16: memref<1x1xf32, #tpu.memory_space<vmem>>, %arg17: memref<8x128xf32, #tpu.memory_space<vmem>>, %arg18: memref<8x128xf32, #tpu.memory_space<vmem>>) attributes {dimension_semantics = [#tpu.dimension_semantics<arbitrary>], iteration_bounds = array<i64: 1>, scalar_prefetch = 0 : i64, scratch_operands = 1 : i64, tpu.core_type = #tpu.core_type<tc>, window_params = [{transform_indices = @transform_0, window_bounds = array<i64: 256, 2>}, {pipeline_mode = #tpu.pipeline_mode<synchronous>, transform_indices = @transform_1, window_bounds = array<i64: 1, 64>}, {pipeline_mode = #tpu.pipeline_mode<synchronous>, transform_indices = @transform_2, window_bounds = array<i64: 1, 64>}, {pipeline_mode = #tpu.pipeline_mode<synchronous>, transform_indices = @transform_3, window_bounds = array<i64: 1, 64>}, {pipeline_mode = #tpu.pipeline_mode<synchronous>, transform_indices = @transform_4, window_bounds = array<i64: 64, 128>}, {pipeline_mode = #tpu.pipeline_mode<synchronous>, transform_indices = @transform_5, window_bounds = array<i64: 1, 128>}, {pipeline_mode = #tpu.pipeline_mode<synchronous>, transform_indices = @transform_6, window_bounds = array<i64: 128, 128>}, {pipeline_mode = #tpu.pipeline_mode<synchronous>, transform_indices = @transform_7, window_bounds = array<i64: 1, 128>}, {pipeline_mode = #tpu.pipeline_mode<synchronous>, transform_indices = @transform_8, window_bounds = array<i64: 128, 128>}, {pipeline_mode = #tpu.pipeline_mode<synchronous>, transform_indices = @transform_9, window_bounds = array<i64: 1, 128>}, {pipeline_mode = #tpu.pipeline_mode<synchronous>, transform_indices = @transform_10, window_bounds = array<i64: 128, 128>}, {pipeline_mode = #tpu.pipeline_mode<synchronous>, transform_indices = @transform_11, window_bounds = array<i64: 1, 128>}, {pipeline_mode = #tpu.pipeline_mode<synchronous>, transform_indices = @transform_12, window_bounds = array<i64: 128, 128>}, {pipeline_mode = #tpu.pipeline_mode<synchronous>, transform_indices = @transform_13, window_bounds = array<i64: 1, 128>}, {pipeline_mode = #tpu.pipeline_mode<synchronous>, transform_indices = @transform_14, window_bounds = array<i64: 1, 128>}, {pipeline_mode = #tpu.pipeline_mode<synchronous>, transform_indices = @transform_15, window_bounds = array<i64: 1, 1>}, {pipeline_mode = #tpu.pipeline_mode<synchronous>, transform_indices = @transform_16, window_bounds = array<i64: 8, 128>}]} {
    %c0_i32 = arith.constant 0 : i32
    %0 = arith.cmpi eq, %arg0, %c0_i32 : i32
    %1 = arith.extui %0 : i1 to i32
    %c0_i32_0 = arith.constant 0 : i32
    %2 = arith.cmpi ne, %1, %c0_i32_0 : i32
    scf.if %2 {
      %cst_32 = arith.constant 0.000000e+00 : f32
      %65 = vector.broadcast %cst_32 : f32 to vector<8x128xf32>
      %c0_33 = arith.constant 0 : index
      %c0_34 = arith.constant 0 : index
      %66 = vector.load %arg18[%c0_33, %c0_34] : memref<8x128xf32, #tpu.memory_space<vmem>>, vector<8x128xf32>
      tpu.vector_store %arg18[%c0_33, %c0_34], %65 {strides = array<i32>} : memref<8x128xf32, #tpu.memory_space<vmem>>, vector<8x128xf32>,
    } else {
    }
    %c0 = arith.constant 0 : index
    %c0_1 = arith.constant 0 : index
    %3 = vector.load %arg1[%c0, %c0_1] : memref<256x2xf32, #tpu.memory_space<vmem>>, vector<256x2xf32>
    %4 = vector.extract_strided_slice %3 {offsets = [0, 0], sizes = [256, 1], strides = [1, 1]} : vector<256x2xf32> to vector<256x1xf32>
    %c0_2 = arith.constant 0 : index
    %c0_3 = arith.constant 0 : index
    %5 = vector.load %arg2[%c0_2, %c0_3] : memref<1x64xf32, #tpu.memory_space<vmem>>, vector<1x64xf32>
    %6 = vector.broadcast %4 : vector<256x1xf32> to vector<256x64xf32>
    %7 = vector.broadcast %5 : vector<1x64xf32> to vector<256x64xf32>
    %8 = arith.mulf %6, %7 : vector<256x64xf32>
    %9 = vector.extract_strided_slice %3 {offsets = [0, 1], sizes = [256, 1], strides = [1, 1]} : vector<256x2xf32> to vector<256x1xf32>
    %c0_4 = arith.constant 0 : index
    %c0_5 = arith.constant 0 : index
    %10 = vector.load %arg3[%c0_4, %c0_5] : memref<1x64xf32, #tpu.memory_space<vmem>>, vector<1x64xf32>
    %11 = vector.broadcast %9 : vector<256x1xf32> to vector<256x64xf32>
    %12 = vector.broadcast %10 : vector<1x64xf32> to vector<256x64xf32>
    %13 = arith.mulf %11, %12 : vector<256x64xf32>
    %14 = arith.addf %8, %13 : vector<256x64xf32>
    %c0_6 = arith.constant 0 : index
    %c0_7 = arith.constant 0 : index
    %15 = vector.load %arg4[%c0_6, %c0_7] : memref<1x64xf32, #tpu.memory_space<vmem>>, vector<1x64xf32>
    %16 = vector.broadcast %15 : vector<1x64xf32> to vector<256x64xf32>
    %17 = arith.addf %14, %16 : vector<256x64xf32>
    %cst = arith.constant 0.000000e+00 : f32
    %18 = vector.broadcast %cst : f32 to vector<256x64xf32>
    %19 = arith.maximumf %17, %18 : vector<256x64xf32>
    %20 = arith.truncf %19 : vector<256x64xf32> to vector<256x64xbf16>
    %c0_8 = arith.constant 0 : index
    %c0_9 = arith.constant 0 : index
    %21 = vector.load %arg5[%c0_8, %c0_9] : memref<64x128xbf16, #tpu.memory_space<vmem>>, vector<64x128xbf16>
    %cst_10 = arith.constant dense<0.000000e+00> : vector<256x128xf32>
    %22 = tpu.matmul %20, %21, %cst_10 {dimension_numbers = #tpu.dot_dimension_numbers<[1], [0], [0], [1], [0, 0, 1, 1], [], []>} : vector<256x64xbf16>, vector<64x128xbf16>, vector<256x128xf32> -> vector<256x128xf32>
    %c0_11 = arith.constant 0 : index
    %c0_12 = arith.constant 0 : index
    %23 = vector.load %arg6[%c0_11, %c0_12] : memref<1x128xf32, #tpu.memory_space<vmem>>, vector<1x128xf32>
    %24 = vector.broadcast %23 : vector<1x128xf32> to vector<256x128xf32>
    %25 = arith.addf %22, %24 : vector<256x128xf32>
    %cst_13 = arith.constant 0.000000e+00 : f32
    %26 = vector.broadcast %cst_13 : f32 to vector<256x128xf32>
    %27 = arith.maximumf %25, %26 : vector<256x128xf32>
    %28 = arith.truncf %27 : vector<256x128xf32> to vector<256x128xbf16>
    %c0_14 = arith.constant 0 : index
    %c0_15 = arith.constant 0 : index
    %29 = vector.load %arg7[%c0_14, %c0_15] : memref<128x128xbf16, #tpu.memory_space<vmem>>, vector<128x128xbf16>
    %cst_16 = arith.constant dense<0.000000e+00> : vector<256x128xf32>
    %30 = tpu.matmul %28, %29, %cst_16 {dimension_numbers = #tpu.dot_dimension_numbers<[1], [0], [0], [1], [0, 0, 1, 1], [], []>} : vector<256x128xbf16>, vector<128x128xbf16>, vector<256x128xf32> -> vector<256x128xf32>
    %c0_17 = arith.constant 0 : index
    %c0_18 = arith.constant 0 : index
    %31 = vector.load %arg8[%c0_17, %c0_18] : memref<1x128xf32, #tpu.memory_space<vmem>>, vector<1x128xf32>
    %32 = vector.broadcast %31 : vector<1x128xf32> to vector<256x128xf32>
    %33 = arith.addf %30, %32 : vector<256x128xf32>
    %cst_19 = arith.constant 0.000000e+00 : f32
    %34 = vector.broadcast %cst_19 : f32 to vector<256x128xf32>
    %35 = arith.maximumf %33, %34 : vector<256x128xf32>
    %36 = arith.truncf %35 : vector<256x128xf32> to vector<256x128xbf16>
    %c0_20 = arith.constant 0 : index
    %c0_21 = arith.constant 0 : index
    %37 = vector.load %arg9[%c0_20, %c0_21] : memref<128x128xbf16, #tpu.memory_space<vmem>>, vector<128x128xbf16>
    %cst_22 = arith.constant dense<0.000000e+00> : vector<256x128xf32>
    %38 = tpu.matmul %36, %37, %cst_22 {dimension_numbers = #tpu.dot_dimension_numbers<[1], [0], [0], [1], [0, 0, 1, 1], [], []>} : vector<256x128xbf16>, vector<128x128xbf16>, vector<256x128xf32> -> vector<256x128xf32>
    %c0_23 = arith.constant 0 : index
    %c0_24 = arith.constant 0 : index
    %39 = vector.load %arg10[%c0_23, %c0_24] : memref<1x128xf32, #tpu.memory_space<vmem>>, vector<1x128xf32>
    %40 = vector.broadcast %39 : vector<1x128xf32> to vector<256x128xf32>
    %41 = arith.addf %38, %40 : vector<256x128xf32>
    %cst_25 = arith.constant 0.000000e+00 : f32
    %42 = vector.broadcast %cst_25 : f32 to vector<256x128xf32>
    %43 = arith.maximumf %41, %42 : vector<256x128xf32>
    %44 = vector.extract_strided_slice %43 {offsets = [0, 0], sizes = [128, 128], strides = [1, 1]} : vector<256x128xf32> to vector<128x128xf32>
    %45 = vector.extract_strided_slice %43 {offsets = [128, 0], sizes = [128, 128], strides = [1, 1]} : vector<256x128xf32> to vector<128x128xf32>
    %46 = arith.maximumf %44, %45 : vector<128x128xf32>
    %47 = vector.extract_strided_slice %46 {offsets = [0, 0], sizes = [64, 128], strides = [1, 1]} : vector<128x128xf32> to vector<64x128xf32>
    %48 = vector.extract_strided_slice %46 {offsets = [64, 0], sizes = [64, 128], strides = [1, 1]} : vector<128x128xf32> to vector<64x128xf32>
    %49 = arith.maximumf %47, %48 : vector<64x128xf32>
    %50 = vector.extract_strided_slice %49 {offsets = [0, 0], sizes = [32, 128], strides = [1, 1]} : vector<64x128xf32> to vector<32x128xf32>
    %51 = vector.extract_strided_slice %49 {offsets = [32, 0], sizes = [32, 128], strides = [1, 1]} : vector<64x128xf32> to vector<32x128xf32>
    %52 = arith.maximumf %50, %51 : vector<32x128xf32>
    %53 = vector.extract_strided_slice %52 {offsets = [0, 0], sizes = [16, 128], strides = [1, 1]} : vector<32x128xf32> to vector<16x128xf32>
    %54 = vector.extract_strided_slice %52 {offsets = [16, 0], sizes = [16, 128], strides = [1, 1]} : vector<32x128xf32> to vector<16x128xf32>
    %55 = arith.maximumf %53, %54 : vector<16x128xf32>
    %56 = vector.extract_strided_slice %55 {offsets = [0, 0], sizes = [8, 128], strides = [1, 1]} : vector<16x128xf32> to vector<8x128xf32>
    %57 = vector.extract_strided_slice %55 {offsets = [8, 0], sizes = [8, 128], strides = [1, 1]} : vector<16x128xf32> to vector<8x128xf32>
    %58 = arith.maximumf %56, %57 : vector<8x128xf32>
    %c0_26 = arith.constant 0 : index
    %c0_27 = arith.constant 0 : index
    %59 = vector.load %arg18[%c0_26, %c0_27] : memref<8x128xf32, #tpu.memory_space<vmem>>, vector<8x128xf32>
    %60 = arith.maximumf %59, %58 : vector<8x128xf32>
    %c0_28 = arith.constant 0 : index
    %c0_29 = arith.constant 0 : index
    %61 = vector.load %arg18[%c0_28, %c0_29] : memref<8x128xf32, #tpu.memory_space<vmem>>, vector<8x128xf32>
    tpu.vector_store %arg18[%c0_28, %c0_29], %60 {strides = array<i32>} : memref<8x128xf32, #tpu.memory_space<vmem>>, vector<8x128xf32>,
    %c0_i32_30 = arith.constant 0 : i32
    %62 = arith.cmpi eq, %arg0, %c0_i32_30 : i32
    %63 = arith.extui %62 : i1 to i32
    %c0_i32_31 = arith.constant 0 : i32
    %64 = arith.cmpi ne, %63, %c0_i32_31 : i32
    scf.if %64 {
      %c0_32 = arith.constant 0 : index
      %c0_33 = arith.constant 0 : index
      %65 = vector.load %arg18[%c0_32, %c0_33] : memref<8x128xf32, #tpu.memory_space<vmem>>, vector<8x128xf32>
      %cst_34 = arith.constant dense<0xFF800000> : vector<128xf32>
      %66 = vector.multi_reduction <maximumf>, %65, %cst_34 [0] : vector<8x128xf32> to vector<128xf32>
      %67 = vector.shape_cast %66 : vector<128xf32> to vector<1x128xf32>
      %68 = arith.truncf %67 : vector<1x128xf32> to vector<1x128xbf16>
      %c0_35 = arith.constant 0 : index
      %c0_36 = arith.constant 0 : index
      %69 = vector.load %arg11[%c0_35, %c0_36] : memref<128x128xbf16, #tpu.memory_space<vmem>>, vector<128x128xbf16>
      %cst_37 = arith.constant dense<0.000000e+00> : vector<1x128xf32>
      %70 = tpu.matmul %68, %69, %cst_37 {dimension_numbers = #tpu.dot_dimension_numbers<[1], [0], [0], [1], [0, 0, 1, 1], [], []>} : vector<1x128xbf16>, vector<128x128xbf16>, vector<1x128xf32> -> vector<1x128xf32>
      %c0_38 = arith.constant 0 : index
      %c0_39 = arith.constant 0 : index
      %71 = vector.load %arg12[%c0_38, %c0_39] : memref<1x128xf32, #tpu.memory_space<vmem>>, vector<1x128xf32>
      %72 = arith.addf %70, %71 : vector<1x128xf32>
      %cst_40 = arith.constant 0.000000e+00 : f32
      %73 = vector.broadcast %cst_40 : f32 to vector<1x128xf32>
      %74 = arith.maximumf %72, %73 : vector<1x128xf32>
      %75 = arith.truncf %74 : vector<1x128xf32> to vector<1x128xbf16>
      %c0_41 = arith.constant 0 : index
      %c0_42 = arith.constant 0 : index
      %76 = vector.load %arg13[%c0_41, %c0_42] : memref<128x128xbf16, #tpu.memory_space<vmem>>, vector<128x128xbf16>
      %cst_43 = arith.constant dense<0.000000e+00> : vector<1x128xf32>
      %77 = tpu.matmul %75, %76, %cst_43 {dimension_numbers = #tpu.dot_dimension_numbers<[1], [0], [0], [1], [0, 0, 1, 1], [], []>} : vector<1x128xbf16>, vector<128x128xbf16>, vector<1x128xf32> -> vector<1x128xf32>
      %c0_44 = arith.constant 0 : index
      %c0_45 = arith.constant 0 : index
      %78 = vector.load %arg14[%c0_44, %c0_45] : memref<1x128xf32, #tpu.memory_space<vmem>>, vector<1x128xf32>
      %79 = arith.addf %77, %78 : vector<1x128xf32>
      %cst_46 = arith.constant 0.000000e+00 : f32
      %80 = vector.broadcast %cst_46 : f32 to vector<1x128xf32>
      %81 = arith.maximumf %79, %80 : vector<1x128xf32>
      %c0_47 = arith.constant 0 : index
      %c0_48 = arith.constant 0 : index
      %82 = vector.load %arg15[%c0_47, %c0_48] : memref<1x128xf32, #tpu.memory_space<vmem>>, vector<1x128xf32>
      %83 = arith.mulf %81, %82 : vector<1x128xf32>
      %cst_49 = arith.constant dense<0.000000e+00> : vector<1xf32>
      %84 = vector.multi_reduction <add>, %83, %cst_49 [1] : vector<1x128xf32> to vector<1xf32>
      %85 = vector.shape_cast %84 : vector<1xf32> to vector<1x1xf32>
      %c0_50 = arith.constant 0 : index
      %c0_51 = arith.constant 0 : index
      %86 = vector.load %arg16[%c0_50, %c0_51] : memref<1x1xf32, #tpu.memory_space<vmem>>, vector<1x1xf32>
      %87 = arith.addf %85, %86 : vector<1x1xf32>
      %88 = vector.shape_cast %87 : vector<1x1xf32> to vector<1x1xf32>
      %89 = vector.broadcast %88 : vector<1x1xf32> to vector<8x128xf32>
      %90 = arith.negf %89 : vector<8x128xf32>
      %91 = math.exp %90 : vector<8x128xf32>
      %cst_52 = arith.constant 1.000000e+00 : f32
      %92 = vector.broadcast %cst_52 : f32 to vector<8x128xf32>
      %93 = arith.addf %92, %91 : vector<8x128xf32>
      %94 = arith.divf %92, %93 : vector<8x128xf32>
      %c0_53 = arith.constant 0 : index
      %c0_54 = arith.constant 0 : index
      %95 = vector.load %arg17[%c0_53, %c0_54] : memref<8x128xf32, #tpu.memory_space<vmem>>, vector<8x128xf32>
      tpu.vector_store %arg17[%c0_53, %c0_54], %94 {strides = array<i32>} : memref<8x128xf32, #tpu.memory_space<vmem>>, vector<8x128xf32>,
    } else {
    }
    return
  }
  func.func @transform_0(%arg0: i32) -> (i32, i32) {
    %c0_i32 = arith.constant 0 : i32
    %c0_i32_0 = arith.constant 0 : i32
    return %arg0, %c0_i32 : i32, i32
  }
  func.func @transform_1(%arg0: i32) -> (i32, i32) {
    %c0_i32 = arith.constant 0 : i32
    %c0_i32_0 = arith.constant 0 : i32
    %c0_i32_1 = arith.constant 0 : i32
    return %c0_i32, %c0_i32_0 : i32, i32
  }
  func.func @transform_2(%arg0: i32) -> (i32, i32) {
    %c0_i32 = arith.constant 0 : i32
    %c0_i32_0 = arith.constant 0 : i32
    %c0_i32_1 = arith.constant 0 : i32
    return %c0_i32, %c0_i32_0 : i32, i32
  }
  func.func @transform_3(%arg0: i32) -> (i32, i32) {
    %c0_i32 = arith.constant 0 : i32
    %c0_i32_0 = arith.constant 0 : i32
    %c0_i32_1 = arith.constant 0 : i32
    return %c0_i32, %c0_i32_0 : i32, i32
  }
  func.func @transform_4(%arg0: i32) -> (i32, i32) {
    %c0_i32 = arith.constant 0 : i32
    %c0_i32_0 = arith.constant 0 : i32
    %c0_i32_1 = arith.constant 0 : i32
    return %c0_i32, %c0_i32_0 : i32, i32
  }
  func.func @transform_5(%arg0: i32) -> (i32, i32) {
    %c0_i32 = arith.constant 0 : i32
    %c0_i32_0 = arith.constant 0 : i32
    %c0_i32_1 = arith.constant 0 : i32
    return %c0_i32, %c0_i32_0 : i32, i32
  }
  func.func @transform_6(%arg0: i32) -> (i32, i32) {
    %c0_i32 = arith.constant 0 : i32
    %c0_i32_0 = arith.constant 0 : i32
    %c0_i32_1 = arith.constant 0 : i32
    return %c0_i32, %c0_i32_0 : i32, i32
  }
  func.func @transform_7(%arg0: i32) -> (i32, i32) {
    %c0_i32 = arith.constant 0 : i32
    %c0_i32_0 = arith.constant 0 : i32
    %c0_i32_1 = arith.constant 0 : i32
    return %c0_i32, %c0_i32_0 : i32, i32
  }
  func.func @transform_8(%arg0: i32) -> (i32, i32) {
    %c0_i32 = arith.constant 0 : i32
    %c0_i32_0 = arith.constant 0 : i32
    %c0_i32_1 = arith.constant 0 : i32
    return %c0_i32, %c0_i32_0 : i32, i32
  }
  func.func @transform_9(%arg0: i32) -> (i32, i32) {
    %c0_i32 = arith.constant 0 : i32
    %c0_i32_0 = arith.constant 0 : i32
    %c0_i32_1 = arith.constant 0 : i32
    return %c0_i32, %c0_i32_0 : i32, i32
  }
  func.func @transform_10(%arg0: i32) -> (i32, i32) {
    %c0_i32 = arith.constant 0 : i32
    %c0_i32_0 = arith.constant 0 : i32
    %c0_i32_1 = arith.constant 0 : i32
    return %c0_i32, %c0_i32_0 : i32, i32
  }
  func.func @transform_11(%arg0: i32) -> (i32, i32) {
    %c0_i32 = arith.constant 0 : i32
    %c0_i32_0 = arith.constant 0 : i32
    %c0_i32_1 = arith.constant 0 : i32
    return %c0_i32, %c0_i32_0 : i32, i32
  }
  func.func @transform_12(%arg0: i32) -> (i32, i32) {
    %c0_i32 = arith.constant 0 : i32
    %c0_i32_0 = arith.constant 0 : i32
    %c0_i32_1 = arith.constant 0 : i32
    return %c0_i32, %c0_i32_0 : i32, i32
  }
  func.func @transform_13(%arg0: i32) -> (i32, i32) {
    %c0_i32 = arith.constant 0 : i32
    %c0_i32_0 = arith.constant 0 : i32
    %c0_i32_1 = arith.constant 0 : i32
    return %c0_i32, %c0_i32_0 : i32, i32
  }
  func.func @transform_14(%arg0: i32) -> (i32, i32) {
    %c0_i32 = arith.constant 0 : i32
    %c0_i32_0 = arith.constant 0 : i32
    %c0_i32_1 = arith.constant 0 : i32
    return %c0_i32, %c0_i32_0 : i32, i32
  }
  func.func @transform_15(%arg0: i32) -> (i32, i32) {
    %c0_i32 = arith.constant 0 : i32
    %c0_i32_0 = arith.constant 0 : i32
    %c0_i32_1 = arith.constant 0 : i32
    return %c0_i32, %c0_i32_0 : i32, i32
  }
  func.func @transform_16(%arg0: i32) -> (i32, i32) {
    %c0_i32 = arith.constant 0 : i32
    %c0_i32_0 = arith.constant 0 : i32
    %c0_i32_1 = arith.constant 0 : i32
    return %c0_i32, %c0_i32_0 : i32, i32
  }
}

</mosaic_0001>

<llo_original>
// kernel: delta_estimator.1
$region0: #{delta_estimator.1}
  #allocation0 [shape = 'u32[]', space=smem, size = 0x4, offset = 0x4, fixed_abs, tag = 'smem constant byte address 0x4 - core index']
  #allocation1 [shape = 'u32[144,128]{1,0:T(1,128)}', space=vmem, size = 0x12000, scoped, tag = 'internal scratch']
  #allocation2 [shape = 'f32[8,128]{1,0:T(8,128)}', space=vmem, size = 0x1000, scoped, tag = 'scratch operand']
  #allocation3 [shape = 'f32[1,1]{1,0:T(1,128)S(1)}', space=vmem, size = 0x200, scoped, tag = 'scoped memory for delta_estimator.1']
  %s0 = inlined_call_operand.vmem [shape: f32[256,2], index: 0, kind: input, shape index: {}]
  %s1 = inlined_call_operand.vmem [shape: f32[1,64], index: 1, kind: input, shape index: {}]
  %s2 = inlined_call_operand.vmem [shape: f32[1,64], index: 2, kind: input, shape index: {}]
  %s3 = inlined_call_operand.vmem [shape: f32[1,64], index: 3, kind: input, shape index: {}]
  %s4 = inlined_call_operand.vmem [shape: bf16[64,128], index: 4, kind: input, shape index: {}]
  %s5 = inlined_call_operand.vmem [shape: f32[1,128], index: 5, kind: input, shape index: {}]
  %s6 = inlined_call_operand.vmem [shape: bf16[128,128], index: 6, kind: input, shape index: {}]
  %s7 = inlined_call_operand.vmem [shape: f32[1,128], index: 7, kind: input, shape index: {}]
  %s8 = inlined_call_operand.vmem [shape: bf16[128,128], index: 8, kind: input, shape index: {}]
  %s9 = inlined_call_operand.vmem [shape: f32[1,128], index: 9, kind: input, shape index: {}]
  %s10 = inlined_call_operand.vmem [shape: bf16[128,128], index: 10, kind: input, shape index: {}]
  %s11 = inlined_call_operand.vmem [shape: f32[1,128], index: 11, kind: input, shape index: {}]
  %s12 = inlined_call_operand.vmem [shape: bf16[128,128], index: 12, kind: input, shape index: {}]
  %s13 = inlined_call_operand.vmem [shape: f32[1,128], index: 13, kind: input, shape index: {}]
  %s14 = inlined_call_operand.vmem [shape: f32[1,128], index: 14, kind: input, shape index: {}]
  %s15 = inlined_call_operand.<no memory space> [shape: f32[1,1], index: 15, kind: input, shape index: {}]
  %s16 = inlined_call_operand.vmem [shape: f32[8,128], index: 16, kind: output, shape index: {}]
  %s17 = sld [smem:[#allocation0]]
  $region82: #{delta_estimator.1} parent=0
    _
  %s19 = ssub.s32 1, %s17
  %s20 = scalar_select 0, %s19, %s17
  %v21 = vstv %s15
  %22 = vst [vmem:[#allocation3] sm:$0x1] %v21
  // Predicated region
  $region2: #{delta_estimator.1} parent=0 // pred_check
    _
  $region3: #{delta_estimator.1} parent=0 // pred_check_branch
    %24 = sbr.rel (0) target = $region5
  $region4: #{delta_estimator.1} parent=0 // pred_region
    _
  $region5: #{delta_estimator.1} parent=0 // pred_fallthru
    _
  // Predicated region
  $region6: #{delta_estimator.1} parent=0 // pred_check
    _
  $region7: #{delta_estimator.1} parent=0 // pred_check_branch
    %26 = sbr.rel (0) target = $region9
  $region8: #{delta_estimator.1} parent=0 // pred_region
    _
  $region9: #{delta_estimator.1} parent=0 // pred_fallthru
    _
  // Predicated region
  $region10: #{delta_estimator.1} parent=0 // pred_check
    _
  $region11: #{delta_estimator.1} parent=0 // pred_check_branch
    %28 = sbr.rel (0) target = $region13
  $region12: #{delta_estimator.1} parent=0 // pred_region
    _
  $region13: #{delta_estimator.1} parent=0 // pred_fallthru
    _
  // Predicated region
  $region14: #{delta_estimator.1} parent=0 // pred_check
    _
  $region15: #{delta_estimator.1} parent=0 // pred_check_branch
    %30 = sbr.rel (0) target = $region17
  $region16: #{delta_estimator.1} parent=0 // pred_region
    _
  $region17: #{delta_estimator.1} parent=0 // pred_fallthru
    _
  // Predicated region
  $region18: #{delta_estimator.1} parent=0 // pred_check
    _
  $region19: #{delta_estimator.1} parent=0 // pred_check_branch
    %32 = sbr.rel (0) target = $region21
  $region20: #{delta_estimator.1} parent=0 // pred_region
    _
  $region21: #{delta_estimator.1} parent=0 // pred_fallthru
    _
  // Predicated region
  $region22: #{delta_estimator.1} parent=0 // pred_check
    _
  $region23: #{delta_estimator.1} parent=0 // pred_check_branch
    %34 = sbr.rel (0) target = $region25
  $region24: #{delta_estimator.1} parent=0 // pred_region
    _
  $region25: #{delta_estimator.1} parent=0 // pred_fallthru
    _
  // Predicated region
  $region26: #{delta_estimator.1} parent=0 // pred_check
    _
  $region27: #{delta_estimator.1} parent=0 // pred_check_branch
    %36 = sbr.rel (0) target = $region29
  $region28: #{delta_estimator.1} parent=0 // pred_region
    _
  $region29: #{delta_estimator.1} parent=0 // pred_fallthru
    _
  // Predicated region
  $region30: #{delta_estimator.1} parent=0 // pred_check
    _
  $region31: #{delta_estimator.1} parent=0 // pred_check_branch
    %38 = sbr.rel (0) target = $region33
  $region32: #{delta_estimator.1} parent=0 // pred_region
    _
  $region33: #{delta_estimator.1} parent=0 // pred_fallthru
    _
  // Predicated region
  $region34: #{delta_estimator.1} parent=0 // pred_check
    _
  $region35: #{delta_estimator.1} parent=0 // pred_check_branch
    %40 = sbr.rel (0) target = $region37
  $region36: #{delta_estimator.1} parent=0 // pred_region
    _
  $region37: #{delta_estimator.1} parent=0 // pred_fallthru
    _
  // Predicated region
  $region38: #{delta_estimator.1} parent=0 // pred_check
    _
  $region39: #{delta_estimator.1} parent=0 // pred_check_branch
    %42 = sbr.rel (0) target = $region41
  $region40: #{delta_estimator.1} parent=0 // pred_region
    _
  $region41: #{delta_estimator.1} parent=0 // pred_fallthru
    _
  // Predicated region
  $region42: #{delta_estimator.1} parent=0 // pred_check
    _
  $region43: #{delta_estimator.1} parent=0 // pred_check_branch
    %44 = sbr.rel (0) target = $region45
  $region44: #{delta_estimator.1} parent=0 // pred_region
    _
  $region45: #{delta_estimator.1} parent=0 // pred_fallthru
    _
  // Predicated region
  $region46: #{delta_estimator.1} parent=0 // pred_check
    _
  $region47: #{delta_estimator.1} parent=0 // pred_check_branch
    %46 = sbr.rel (0) target = $region49
  $region48: #{delta_estimator.1} parent=0 // pred_region
    _
  $region49: #{delta_estimator.1} parent=0 // pred_fallthru
    _
  // Predicated region
  $region50: #{delta_estimator.1} parent=0 // pred_check
    _
  $region51: #{delta_estimator.1} parent=0 // pred_check_branch
    %48 = sbr.rel (0) target = $region53
  $region52: #{delta_estimator.1} parent=0 // pred_region
    _
  $region53: #{delta_estimator.1} parent=0 // pred_fallthru
    _
  // Predicated region
  $region54: #{delta_estimator.1} parent=0 // pred_check
    _
  $region55: #{delta_estimator.1} parent=0 // pred_check_branch
    %50 = sbr.rel (0) target = $region57
  $region56: #{delta_estimator.1} parent=0 // pred_region
    _
  $region57: #{delta_estimator.1} parent=0 // pred_fallthru
    _
  // Predicated region
  $region58: #{delta_estimator.1} parent=0 // pred_check
    _
  $region59: #{delta_estimator.1} parent=0 // pred_check_branch
    %52 = sbr.rel (0) target = $region61
  $region60: #{delta_estimator.1} parent=0 // pred_region
    _
  $region61: #{delta_estimator.1} parent=0 // pred_fallthru
    _
  // Predicated region
  $region62: #{delta_estimator.1} parent=0 // pred_check
    _
  $region63: #{delta_estimator.1} parent=0 // pred_check_branch
    %54 = sbr.rel (0) target = $region65
  $region64: #{delta_estimator.1} parent=0 // pred_region
    _
  $region65: #{delta_estimator.1} parent=0 // pred_fallthru
    _
  %p56 = scmp.eq.s32.totalorder 0, 0
  // Predicated region
  $region66: #{delta_estimator.1} parent=0 // pred_check
    %p57 = pneg %p56
  $region67: #{delta_estimator.1} parent=0 // pred_check_branch
    %59 = sbr.rel (%p57) target = $region69
  $region68: #{delta_estimator.1} parent=0 // pred_region
    %60 = vst [vmem:[#allocation2] sm:$0xff] 0.0
  $region69: #{delta_estimator.1} parent=0 // pred_fallthru
    _
  %v61 = vld [vmem:[%s0] sm:$0xff]
  %v62 = vld [vmem:[%s0 + $0x8] sm:$0xff]
  %v63 = vld [vmem:[%s0 + $0x10] sm:$0xff]
  %v64 = vld [vmem:[%s0 + $0x18] sm:$0xff]
  %v65 = vld [vmem:[%s0 + $0x20] sm:$0xff]
  %v66 = vld [vmem:[%s0 + $0x28] sm:$0xff]
  %v67 = vld [vmem:[%s0 + $0x30] sm:$0xff]
  %v68 = vld [vmem:[%s0 + $0x38] sm:$0xff]
  %v69 = vld [vmem:[%s0 + $0x40] sm:$0xff]
  %v70 = vld [vmem:[%s0 + $0x48] sm:$0xff]
  %v71 = vld [vmem:[%s0 + $0x50] sm:$0xff]
  %v72 = vld [vmem:[%s0 + $0x58] sm:$0xff]
  %v73 = vld [vmem:[%s0 + $0x60] sm:$0xff]
  %v74 = vld [vmem:[%s0 + $0x68] sm:$0xff]
  %v75 = vld [vmem:[%s0 + $0x70] sm:$0xff]
  %v76 = vld [vmem:[%s0 + $0x78] sm:$0xff]
  %v77 = vld [vmem:[%s0 + $0x80] sm:$0xff]
  %v78 = vld [vmem:[%s0 + $0x88] sm:$0xff]
  %v79 = vld [vmem:[%s0 + $0x90] sm:$0xff]
  %v80 = vld [vmem:[%s0 + $0x98] sm:$0xff]
  %v81 = vld [vmem:[%s0 + $0xa0] sm:$0xff]
  %v82 = vld [vmem:[%s0 + $0xa8] sm:$0xff]
  %v83 = vld [vmem:[%s0 + $0xb0] sm:$0xff]
  %v84 = vld [vmem:[%s0 + $0xb8] sm:$0xff]
  %v85 = vld [vmem:[%s0 + $0xc0] sm:$0xff]
  %v86 = vld [vmem:[%s0 + $0xc8] sm:$0xff]
  %v87 = vld [vmem:[%s0 + $0xd0] sm:$0xff]
  %v88 = vld [vmem:[%s0 + $0xd8] sm:$0xff]
  %v89 = vld [vmem:[%s0 + $0xe0] sm:$0xff]
  %v90 = vld [vmem:[%s0 + $0xe8] sm:$0xff]
  %v91 = vld [vmem:[%s0 + $0xf0] sm:$0xff]
  %v92 = vld [vmem:[%s0 + $0xf8] sm:$0xff]
  %v93 = vld [vmem:[%s1] sm:$0x1]
  %95 = vset.pattern.permute.xlu0 0
  %96 = vperm.xlu0 %95, %v61
  %v97 = vpop.permute.xlu0 %96
  %100 = vset.pattern.permute.xlu0 0
  %101 = vperm.xlu0 %100, %v62
  %v102 = vpop.permute.xlu0 %101
  %105 = vset.pattern.permute.xlu0 0
  %106 = vperm.xlu0 %105, %v63
  %v107 = vpop.permute.xlu0 %106
  %110 = vset.pattern.permute.xlu0 0
  %111 = vperm.xlu0 %110, %v64
  %v112 = vpop.permute.xlu0 %111
  %115 = vset.pattern.permute.xlu0 0
  %116 = vperm.xlu0 %115, %v65
  %v117 = vpop.permute.xlu0 %116
  %120 = vset.pattern.permute.xlu0 0
  %121 = vperm.xlu0 %120, %v66
  %v122 = vpop.permute.xlu0 %121
  %125 = vset.pattern.permute.xlu0 0
  %126 = vperm.xlu0 %125, %v67
  %v127 = vpop.permute.xlu0 %126
  %130 = vset.pattern.permute.xlu0 0
  %131 = vperm.xlu0 %130, %v68
  %v132 = vpop.permute.xlu0 %131
  %135 = vset.pattern.permute.xlu0 0
  %136 = vperm.xlu0 %135, %v69
  %v137 = vpop.permute.xlu0 %136
  %140 = vset.pattern.permute.xlu0 0
  %141 = vperm.xlu0 %140, %v70
  %v142 = vpop.permute.xlu0 %141
  %145 = vset.pattern.permute.xlu0 0
  %146 = vperm.xlu0 %145, %v71
  %v147 = vpop.permute.xlu0 %146
  %150 = vset.pattern.permute.xlu0 0
  %151 = vperm.xlu0 %150, %v72
  %v152 = vpop.permute.xlu0 %151
  %155 = vset.pattern.permute.xlu0 0
  %156 = vperm.xlu0 %155, %v73
  %v157 = vpop.permute.xlu0 %156
  %160 = vset.pattern.permute.xlu0 0
  %161 = vperm.xlu0 %160, %v74
  %v162 = vpop.permute.xlu0 %161
  %165 = vset.pattern.permute.xlu0 0
  %166 = vperm.xlu0 %165, %v75
  %v167 = vpop.permute.xlu0 %166
  %170 = vset.pattern.permute.xlu0 0
  %171 = vperm.xlu0 %170, %v76
  %v172 = vpop.permute.xlu0 %171
  %175 = vset.pattern.permute.xlu0 0
  %176 = vperm.xlu0 %175, %v77
  %v177 = vpop.permute.xlu0 %176
  %180 = vset.pattern.permute.xlu0 0
  %181 = vperm.xlu0 %180, %v78
  %v182 = vpop.permute.xlu0 %181
  %185 = vset.pattern.permute.xlu0 0
  %186 = vperm.xlu0 %185, %v79
  %v187 = vpop.permute.xlu0 %186
  %190 = vset.pattern.permute.xlu0 0
  %191 = vperm.xlu0 %190, %v80
  %v192 = vpop.permute.xlu0 %191
  %195 = vset.pattern.permute.xlu0 0
  %196 = vperm.xlu0 %195, %v81
  %v197 = vpop.permute.xlu0 %196
  %200 = vset.pattern.permute.xlu0 0
  %201 = vperm.xlu0 %200, %v82
  %v202 = vpop.permute.xlu0 %201
  %205 = vset.pattern.permute.xlu0 0
  %206 = vperm.xlu0 %205, %v83
  %v207 = vpop.permute.xlu0 %206
  %210 = vset.pattern.permute.xlu0 0
  %211 = vperm.xlu0 %210, %v84
  %v212 = vpop.permute.xlu0 %211
  %215 = vset.pattern.permute.xlu0 0
  %216 = vperm.xlu0 %215, %v85
  %v217 = vpop.permute.xlu0 %216
  %220 = vset.pattern.permute.xlu0 0
  %221 = vperm.xlu0 %220, %v86
  %v222 = vpop.permute.xlu0 %221
  %225 = vset.pattern.permute.xlu0 0
  %226 = vperm.xlu0 %225, %v87
  %v227 = vpop.permute.xlu0 %226
  %230 = vset.pattern.permute.xlu0 0
  %231 = vperm.xlu0 %230, %v88
  %v232 = vpop.permute.xlu0 %231
  %235 = vset.pattern.permute.xlu0 0
  %236 = vperm.xlu0 %235, %v89
  %v237 = vpop.permute.xlu0 %236
  %240 = vset.pattern.permute.xlu0 0
  %241 = vperm.xlu0 %240, %v90
  %v242 = vpop.permute.xlu0 %241
  %245 = vset.pattern.permute.xlu0 0
  %246 = vperm.xlu0 %245, %v91
  %v247 = vpop.permute.xlu0 %246
  %250 = vset.pattern.permute.xlu0 0
  %251 = vperm.xlu0 %250, %v92
  %v252 = vpop.permute.xlu0 %251
  %v255 = vlaneseq
  %v256 = vshrl.u32 %v255, 7
  %v257 = vsub.s32 0, %v256
  %v258 = vrot.slane %v93, %v257
  %v260 = vmul.f32 %v97, %v258
  %v261 = vmul.f32 %v102, %v258
  %v262 = vmul.f32 %v107, %v258
  %v263 = vmul.f32 %v112, %v258
  %v264 = vmul.f32 %v117, %v258
  %v265 = vmul.f32 %v122, %v258
  %v266 = vmul.f32 %v127, %v258
  %v267 = vmul.f32 %v132, %v258
  %v268 = vmul.f32 %v137, %v258
  %v269 = vmul.f32 %v142, %v258
  %v270 = vmul.f32 %v147, %v258
  %v271 = vmul.f32 %v152, %v258
  %v272 = vmul.f32 %v157, %v258
  %v273 = vmul.f32 %v162, %v258
  %v274 = vmul.f32 %v167, %v258
  %v275 = vmul.f32 %v172, %v258
  %v276 = vmul.f32 %v177, %v258
  %v277 = vmul.f32 %v182, %v258
  %v278 = vmul.f32 %v187, %v258
  %v279 = vmul.f32 %v192, %v258
  %v280 = vmul.f32 %v197, %v258
  %v281 = vmul.f32 %v202, %v258
  %v282 = vmul.f32 %v207, %v258
  %v283 = vmul.f32 %v212, %v258
  %v284 = vmul.f32 %v217, %v258
  %v285 = vmul.f32 %v222, %v258
  %v286 = vmul.f32 %v227, %v258
  %v287 = vmul.f32 %v232, %v258
  %v288 = vmul.f32 %v237, %v258
  %v289 = vmul.f32 %v242, %v258
  %v290 = vmul.f32 %v247, %v258
  %v291 = vmul.f32 %v252, %v258
  %v292 = vld [vmem:[%s2] sm:$0x1]
  %293 = vset.pattern.permute.xlu0 1
  %294 = vperm.xlu0 %293, %v61
  %v295 = vpop.permute.xlu0 %294
  %297 = vset.pattern.permute.xlu0 1
  %298 = vperm.xlu0 %297, %v62
  %v299 = vpop.permute.xlu0 %298
  %301 = vset.pattern.permute.xlu0 1
  %302 = vperm.xlu0 %301, %v63
  %v303 = vpop.permute.xlu0 %302
  %305 = vset.pattern.permute.xlu0 1
  %306 = vperm.xlu0 %305, %v64
  %v307 = vpop.permute.xlu0 %306
  %309 = vset.pattern.permute.xlu0 1
  %310 = vperm.xlu0 %309, %v65
  %v311 = vpop.permute.xlu0 %310
  %313 = vset.pattern.permute.xlu0 1
  %314 = vperm.xlu0 %313, %v66
  %v315 = vpop.permute.xlu0 %314
  %317 = vset.pattern.permute.xlu0 1
  %318 = vperm.xlu0 %317, %v67
  %v319 = vpop.permute.xlu0 %318
  %321 = vset.pattern.permute.xlu0 1
  %322 = vperm.xlu0 %321, %v68
  %v323 = vpop.permute.xlu0 %322
  %325 = vset.pattern.permute.xlu0 1
  %326 = vperm.xlu0 %325, %v69
  %v327 = vpop.permute.xlu0 %326
  %329 = vset.pattern.permute.xlu0 1
  %330 = vperm.xlu0 %329, %v70
  %v331 = vpop.permute.xlu0 %330
  %333 = vset.pattern.permute.xlu0 1
  %334 = vperm.xlu0 %333, %v71
  %v335 = vpop.permute.xlu0 %334
  %337 = vset.pattern.permute.xlu0 1
  %338 = vperm.xlu0 %337, %v72
  %v339 = vpop.permute.xlu0 %338
  %341 = vset.pattern.permute.xlu0 1
  %342 = vperm.xlu0 %341, %v73
  %v343 = vpop.permute.xlu0 %342
  %345 = vset.pattern.permute.xlu0 1
  %346 = vperm.xlu0 %345, %v74
  %v347 = vpop.permute.xlu0 %346
  %349 = vset.pattern.permute.xlu0 1
  %350 = vperm.xlu0 %349, %v75
  %v351 = vpop.permute.xlu0 %350
  %353 = vset.pattern.permute.xlu0 1
  %354 = vperm.xlu0 %353, %v76
  %v355 = vpop.permute.xlu0 %354
  %357 = vset.pattern.permute.xlu0 1
  %358 = vperm.xlu0 %357, %v77
  %v359 = vpop.permute.xlu0 %358
  %361 = vset.pattern.permute.xlu0 1
  %362 = vperm.xlu0 %361, %v78
  %v363 = vpop.permute.xlu0 %362
  %365 = vset.pattern.permute.xlu0 1
  %366 = vperm.xlu0 %365, %v79
  %v367 = vpop.permute.xlu0 %366
  %369 = vset.pattern.permute.xlu0 1
  %370 = vperm.xlu0 %369, %v80
  %v371 = vpop.permute.xlu0 %370
  %373 = vset.pattern.permute.xlu0 1
  %374 = vperm.xlu0 %373, %v81
  %v375 = vpop.permute.xlu0 %374
  %377 = vset.pattern.permute.xlu0 1
  %378 = vperm.xlu0 %377, %v82
  %v379 = vpop.permute.xlu0 %378
  %381 = vset.pattern.permute.xlu0 1
  %382 = vperm.xlu0 %381, %v83
  %v383 = vpop.permute.xlu0 %382
  %385 = vset.pattern.permute.xlu0 1
  %386 = vperm.xlu0 %385, %v84
  %v387 = vpop.permute.xlu0 %386
  %389 = vset.pattern.permute.xlu0 1
  %390 = vperm.xlu0 %389, %v85
  %v391 = vpop.permute.xlu0 %390
  %393 = vset.pattern.permute.xlu0 1
  %394 = vperm.xlu0 %393, %v86
  %v395 = vpop.permute.xlu0 %394
  %397 = vset.pattern.permute.xlu0 1
  %398 = vperm.xlu0 %397, %v87
  %v399 = vpop.permute.xlu0 %398
  %401 = vset.pattern.permute.xlu0 1
  %402 = vperm.xlu0 %401, %v88
  %v403 = vpop.permute.xlu0 %402
  %405 = vset.pattern.permute.xlu0 1
  %406 = vperm.xlu0 %405, %v89
  %v407 = vpop.permute.xlu0 %406
  %409 = vset.pattern.permute.xlu0 1
  %410 = vperm.xlu0 %409, %v90
  %v411 = vpop.permute.xlu0 %410
  %413 = vset.pattern.permute.xlu0 1
  %414 = vperm.xlu0 %413, %v91
  %v415 = vpop.permute.xlu0 %414
  %417 = vset.pattern.permute.xlu0 1
  %418 = vperm.xlu0 %417, %v92
  %v419 = vpop.permute.xlu0 %418
  %v422 = vlaneseq
  %v423 = vshrl.u32 %v422, 7
  %v424 = vsub.s32 0, %v423
  %v425 = vrot.slane %v292, %v424
  %v427 = vmul.f32 %v295, %v425
  %v428 = vmul.f32 %v299, %v425
  %v429 = vmul.f32 %v303, %v425
  %v430 = vmul.f32 %v307, %v425
  %v431 = vmul.f32 %v311, %v425
  %v432 = vmul.f32 %v315, %v425
  %v433 = vmul.f32 %v319, %v425
  %v434 = vmul.f32 %v323, %v425
  %v435 = vmul.f32 %v327, %v425
  %v436 = vmul.f32 %v331, %v425
  %v437 = vmul.f32 %v335, %v425
  %v438 = vmul.f32 %v339, %v425
  %v439 = vmul.f32 %v343, %v425
  %v440 = vmul.f32 %v347, %v425
  %v441 = vmul.f32 %v351, %v425
  %v442 = vmul.f32 %v355, %v425
  %v443 = vmul.f32 %v359, %v425
  %v444 = vmul.f32 %v363, %v425
  %v445 = vmul.f32 %v367, %v425
  %v446 = vmul.f32 %v371, %v425
  %v447 = vmul.f32 %v375, %v425
  %v448 = vmul.f32 %v379, %v425
  %v449 = vmul.f32 %v383, %v425
  %v450 = vmul.f32 %v387, %v425
  %v451 = vmul.f32 %v391, %v425
  %v452 = vmul.f32 %v395, %v425
  %v453 = vmul.f32 %v399, %v425
  %v454 = vmul.f32 %v403, %v425
  %v455 = vmul.f32 %v407, %v425
  %v456 = vmul.f32 %v411, %v425
  %v457 = vmul.f32 %v415, %v425
  %v458 = vmul.f32 %v419, %v425
  %v459 = vadd.f32 %v260, %v427
  %v460 = vadd.f32 %v261, %v428
  %v461 = vadd.f32 %v262, %v429
  %v462 = vadd.f32 %v263, %v430
  %v463 = vadd.f32 %v264, %v431
  %v464 = vadd.f32 %v265, %v432
  %v465 = vadd.f32 %v266, %v433
  %v466 = vadd.f32 %v267, %v434
  %v467 = vadd.f32 %v268, %v435
  %v468 = vadd.f32 %v269, %v436
  %v469 = vadd.f32 %v270, %v437
  %v470 = vadd.f32 %v271, %v438
  %v471 = vadd.f32 %v272, %v439
  %v472 = vadd.f32 %v273, %v440
  %v473 = vadd.f32 %v274, %v441
  %v474 = vadd.f32 %v275, %v442
  %v475 = vadd.f32 %v276, %v443
  %v476 = vadd.f32 %v277, %v444
  %v477 = vadd.f32 %v278, %v445
  %v478 = vadd.f32 %v279, %v446
  %v479 = vadd.f32 %v280, %v447
  %v480 = vadd.f32 %v281, %v448
  %v481 = vadd.f32 %v282, %v449
  %v482 = vadd.f32 %v283, %v450
  %v483 = vadd.f32 %v284, %v451
  %v484 = vadd.f32 %v285, %v452
  %v485 = vadd.f32 %v286, %v453
  %v486 = vadd.f32 %v287, %v454
  %v487 = vadd.f32 %v288, %v455
  %v488 = vadd.f32 %v289, %v456
  %v489 = vadd.f32 %v290, %v457
  %v490 = vadd.f32 %v291, %v458
  %v491 = vld [vmem:[%s3] sm:$0x1]
  %v493 = vlaneseq
  %v494 = vshrl.u32 %v493, 7
  %v495 = vsub.s32 0, %v494
  %v496 = vrot.slane %v491, %v495
  %v498 = vadd.f32 %v459, %v496
  %v499 = vadd.f32 %v460, %v496
  %v500 = vadd.f32 %v461, %v496
  %v501 = vadd.f32 %v462, %v496
  %v502 = vadd.f32 %v463, %v496
  %v503 = vadd.f32 %v464, %v496
  %v504 = vadd.f32 %v465, %v496
  %v505 = vadd.f32 %v466, %v496
  %v506 = vadd.f32 %v467, %v496
  %v507 = vadd.f32 %v468, %v496
  %v508 = vadd.f32 %v469, %v496
  %v509 = vadd.f32 %v470, %v496
  %v510 = vadd.f32 %v471, %v496
  %v511 = vadd.f32 %v472, %v496
  %v512 = vadd.f32 %v473, %v496
  %v513 = vadd.f32 %v474, %v496
  %v514 = vadd.f32 %v475, %v496
  %v515 = vadd.f32 %v476, %v496
  %v516 = vadd.f32 %v477, %v496
  %v517 = vadd.f32 %v478, %v496
  %v518 = vadd.f32 %v479, %v496
  %v519 = vadd.f32 %v480, %v496
  %v520 = vadd.f32 %v481, %v496
  %v521 = vadd.f32 %v482, %v496
  %v522 = vadd.f32 %v483, %v496
  %v523 = vadd.f32 %v484, %v496
  %v524 = vadd.f32 %v485, %v496
  %v525 = vadd.f32 %v486, %v496
  %v526 = vadd.f32 %v487, %v496
  %v527 = vadd.f32 %v488, %v496
  %v528 = vadd.f32 %v489, %v496
  %v529 = vadd.f32 %v490, %v496
  %v530 = vmax.f32 %v498, 0.0
  %v531 = vmax.f32 %v499, 0.0
  %v532 = vmax.f32 %v500, 0.0
  %v533 = vmax.f32 %v501, 0.0
  %v534 = vmax.f32 %v502, 0.0
  %v535 = vmax.f32 %v503, 0.0
  %v536 = vmax.f32 %v504, 0.0
  %v537 = vmax.f32 %v505, 0.0
  %v538 = vmax.f32 %v506, 0.0
  %v539 = vmax.f32 %v507, 0.0
  %v540 = vmax.f32 %v508, 0.0
  %v541 = vmax.f32 %v509, 0.0
  %v542 = vmax.f32 %v510, 0.0
  %v543 = vmax.f32 %v511, 0.0
  %v544 = vmax.f32 %v512, 0.0
  %v545 = vmax.f32 %v513, 0.0
  %v546 = vmax.f32 %v514, 0.0
  %v547 = vmax.f32 %v515, 0.0
  %v548 = vmax.f32 %v516, 0.0
  %v549 = vmax.f32 %v517, 0.0
  %v550 = vmax.f32 %v518, 0.0
  %v551 = vmax.f32 %v519, 0.0
  %v552 = vmax.f32 %v520, 0.0
  %v553 = vmax.f32 %v521, 0.0
  %v554 = vmax.f32 %v522, 0.0
  %v555 = vmax.f32 %v523, 0.0
  %v556 = vmax.f32 %v524, 0.0
  %v557 = vmax.f32 %v525, 0.0
  %v558 = vmax.f32 %v526, 0.0
  %v559 = vmax.f32 %v527, 0.0
  %v560 = vmax.f32 %v528, 0.0
  %v561 = vmax.f32 %v529, 0.0
  %v562 = vpack.c.bf16 %v531, %v530
  %v563 = vpack.c.bf16 %v533, %v532
  %v564 = vpack.c.bf16 %v535, %v534
  %v565 = vpack.c.bf16 %v537, %v536
  %v566 = vpack.c.bf16 %v539, %v538
  %v567 = vpack.c.bf16 %v541, %v540
  %v568 = vpack.c.bf16 %v543, %v542
  %v569 = vpack.c.bf16 %v545, %v544
  %v570 = vpack.c.bf16 %v547, %v546
  %v571 = vpack.c.bf16 %v549, %v548
  %v572 = vpack.c.bf16 %v551, %v550
  %v573 = vpack.c.bf16 %v553, %v552
  %v574 = vpack.c.bf16 %v555, %v554
  %v575 = vpack.c.bf16 %v557, %v556
  %v576 = vpack.c.bf16 %v559, %v558
  %v577 = vpack.c.bf16 %v561, %v560
  %v578 = vld [vmem:[%s4] sm:$0xf]
  %v579 = vld [vmem:[%s4 + $0x4] sm:$0xf]
  %v580 = vld [vmem:[%s4 + $0x8] sm:$0xf]
  %v581 = vld [vmem:[%s4 + $0xc] sm:$0xf]
  %v582 = vld [vmem:[%s4 + $0x10] sm:$0xf]
  %v583 = vld [vmem:[%s4 + $0x14] sm:$0xf]
  %v584 = vld [vmem:[%s4 + $0x18] sm:$0xf]
  %v585 = vld [vmem:[%s4 + $0x1c] sm:$0xf]
  %v586 = vld [vmem:[%s5] sm:$0x1]
  %v588 = vlaneseq
  %v589 = vshrl.u32 %v588, 7
  %v590 = vsub.s32 0, %v589
  %v591 = vrot.slane %v586, %v590
  %v601 = vunpack.c.l.b16 %v578
  %v602 = vunpack.c.l.b16 %v579
  %v603 = vunpack.c.l.b16 %v580
  %v604 = vunpack.c.l.b16 %v581
  %v605 = vunpack.c.l.b16 %v582
  %v606 = vunpack.c.l.b16 %v583
  %v607 = vunpack.c.l.b16 %v584
  %v608 = vunpack.c.l.b16 %v585
  %v609 = vpack.c.b16 %v602, %v601
  %v610 = vpack.c.b16 %v604, %v603
  %v611 = vpack.c.b16 %v606, %v605
  %v612 = vpack.c.b16 %v608, %v607
  %vm617 = vcmask 523264
  %v619 = vsel %vm617, %v562, 0
  %v622 = vsel %vm617, %v563, 0
  %v625 = vsel %vm617, %v564, 0
  %v628 = vsel %vm617, %v565, 0
  %v631 = vsel %vm617, %v566, 0
  %v634 = vsel %vm617, %v567, 0
  %v637 = vsel %vm617, %v568, 0
  %v640 = vsel %vm617, %v569, 0
  %v643 = vsel %vm617, %v570, 0
  %v646 = vsel %vm617, %v571, 0
  %v649 = vsel %vm617, %v572, 0
  %v652 = vsel %vm617, %v573, 0
  %v655 = vsel %vm617, %v574, 0
  %v658 = vsel %vm617, %v575, 0
  %v661 = vsel %vm617, %v576, 0
  %v664 = vsel %vm617, %v577, 0
  %666 = vmatprep.subr.bf16.mxu0 0
  %667 = vmatpush1.bf16.msra.mxu0 %v609
  %668 = vmatprep.subr.bf16.mxu0 0
  %669 = vmatpush1.bf16.msra.mxu0 %v610
  %670 = vmatprep.subr.bf16.mxu0 0
  %671 = vmatpush1.bf16.msra.mxu0 %v611
  %672 = vmatprep.subr.bf16.mxu0 0
  %673 = vmatpush1.bf16.msra.mxu0 %v612
  %674 = vmatprep.subr.bf16.mxu0 0
  %675 = vmatpush1.bf16.msra.mxu0 0
  %676 = vmatprep.subr.bf16.mxu0 0
  %677 = vmatpush1.bf16.msra.mxu0 0
  %678 = vmatprep.subr.bf16.mxu0 0
  %679 = vmatpush1.bf16.msra.mxu0 0
  %680 = vmatprep.subr.bf16.mxu0 0
  %681 = vmatpush1.bf16.msra.mxu0 0
  %682 = vmatprep.subr.bf16.mxu0 0
  %683 = vmatpush1.bf16.msra.mxu0 0
  %684 = vmatprep.subr.bf16.mxu0 0
  %685 = vmatpush1.bf16.msra.mxu0 0
  %686 = vmatprep.subr.bf16.mxu0 0
  %687 = vmatpush1.bf16.msra.mxu0 0
  %688 = vmatprep.subr.bf16.mxu0 0
  %689 = vmatpush1.bf16.msra.mxu0 0
  %690 = vmatprep.subr.bf16.mxu0 0
  %691 = vmatpush1.bf16.msra.mxu0 0
  %692 = vmatprep.subr.bf16.mxu0 0
  %693 = vmatpush1.bf16.msra.mxu0 0
  %694 = vmatprep.subr.bf16.mxu0 0
  %695 = vmatpush1.bf16.msra.mxu0 0
  %696 = vmatprep.subr.bf16.mxu0 0
  %697 = vmatpush1.bf16.msra.mxu0 0
  %698 = vmatprep.mubr.bf16.mxu0 0
  %699 = vmatmul.mubr.bf16.gmra.mrb[0].mxu0 %v619
  %v700 = vpop.f32.mrb[0].mxu0
  %v701 = vadd.f32 %v591, %v700
  %v702 = vpop.f32.mrb[0].mxu0
  %v703 = vpop.f32.mrb[0].mxu0
  %v704 = vadd.f32 %v591, %v703
  %v705 = vpop.f32.mrb[0].mxu0
  %706 = vmatprep.mubr.bf16.mxu0 0
  %707 = vmatmul.mubr.bf16.gmra.mrb[0].mxu0 %v622
  %v708 = vpop.f32.mrb[0].mxu0
  %v709 = vadd.f32 %v591, %v708
  %v710 = vpop.f32.mrb[0].mxu0
  %v711 = vpop.f32.mrb[0].mxu0
  %v712 = vadd.f32 %v591, %v711
  %v713 = vpop.f32.mrb[0].mxu0
  %714 = vmatprep.mubr.bf16.mxu0 0
  %715 = vmatmul.mubr.bf16.gmra.mrb[0].mxu0 %v625
  %v716 = vpop.f32.mrb[0].mxu0
  %v717 = vadd.f32 %v591, %v716
  %v718 = vpop.f32.mrb[0].mxu0
  %v719 = vpop.f32.mrb[0].mxu0
  %v720 = vadd.f32 %v591, %v719
  %v721 = vpop.f32.mrb[0].mxu0
  %722 = vmatprep.mubr.bf16.mxu0 0
  %723 = vmatmul.mubr.bf16.gmra.mrb[0].mxu0 %v628
  %v724 = vpop.f32.mrb[0].mxu0
  %v725 = vadd.f32 %v591, %v724
  %v726 = vpop.f32.mrb[0].mxu0
  %v727 = vpop.f32.mrb[0].mxu0
  %v728 = vadd.f32 %v591, %v727
  %v729 = vpop.f32.mrb[0].mxu0
  %730 = vmatprep.mubr.bf16.mxu0 0
  %731 = vmatmul.mubr.bf16.gmra.mrb[0].mxu0 %v631
  %v732 = vpop.f32.mrb[0].mxu0
  %v733 = vadd.f32 %v591, %v732
  %v734 = vpop.f32.mrb[0].mxu0
  %v735 = vpop.f32.mrb[0].mxu0
  %v736 = vadd.f32 %v591, %v735
  %v737 = vpop.f32.mrb[0].mxu0
  %738 = vmatprep.mubr.bf16.mxu0 0
  %739 = vmatmul.mubr.bf16.gmra.mrb[0].mxu0 %v634
  %v740 = vpop.f32.mrb[0].mxu0
  %v741 = vadd.f32 %v591, %v740
  %v742 = vpop.f32.mrb[0].mxu0
  %v743 = vpop.f32.mrb[0].mxu0
  %v744 = vadd.f32 %v591, %v743
  %v745 = vpop.f32.mrb[0].mxu0
  %746 = vmatprep.mubr.bf16.mxu0 0
  %747 = vmatmul.mubr.bf16.gmra.mrb[0].mxu0 %v637
  %v748 = vpop.f32.mrb[0].mxu0
  %v749 = vadd.f32 %v591, %v748
  %v750 = vpop.f32.mrb[0].mxu0
  %v751 = vpop.f32.mrb[0].mxu0
  %v752 = vadd.f32 %v591, %v751
  %v753 = vpop.f32.mrb[0].mxu0
  %754 = vmatprep.mubr.bf16.mxu0 0
  %755 = vmatmul.mubr.bf16.gmra.mrb[0].mxu0 %v640
  %v756 = vpop.f32.mrb[0].mxu0
  %v757 = vadd.f32 %v591, %v756
  %v758 = vpop.f32.mrb[0].mxu0
  %v759 = vpop.f32.mrb[0].mxu0
  %v760 = vadd.f32 %v591, %v759
  %v761 = vpop.f32.mrb[0].mxu0
  %762 = vmatprep.mubr.bf16.mxu0 0
  %763 = vmatmul.mubr.bf16.gmra.mrb[0].mxu0 %v643
  %v764 = vpop.f32.mrb[0].mxu0
  %v765 = vadd.f32 %v591, %v764
  %v766 = vpop.f32.mrb[0].mxu0
  %v767 = vpop.f32.mrb[0].mxu0
  %v768 = vadd.f32 %v591, %v767
  %v769 = vpop.f32.mrb[0].mxu0
  %770 = vmatprep.mubr.bf16.mxu0 0
  %771 = vmatmul.mubr.bf16.gmra.mrb[0].mxu0 %v646
  %v772 = vpop.f32.mrb[0].mxu0
  %v773 = vadd.f32 %v591, %v772
  %v774 = vpop.f32.mrb[0].mxu0
  %v775 = vpop.f32.mrb[0].mxu0
  %v776 = vadd.f32 %v591, %v775
  %v777 = vpop.f32.mrb[0].mxu0
  %778 = vmatprep.mubr.bf16.mxu0 0
  %779 = vmatmul.mubr.bf16.gmra.mrb[0].mxu0 %v649
  %v780 = vpop.f32.mrb[0].mxu0
  %v781 = vadd.f32 %v591, %v780
  %v782 = vpop.f32.mrb[0].mxu0
  %v783 = vpop.f32.mrb[0].mxu0
  %v784 = vadd.f32 %v591, %v783
  %v785 = vpop.f32.mrb[0].mxu0
  %786 = vmatprep.mubr.bf16.mxu0 0
  %787 = vmatmul.mubr.bf16.gmra.mrb[0].mxu0 %v652
  %v788 = vpop.f32.mrb[0].mxu0
  %v789 = vadd.f32 %v591, %v788
  %v790 = vpop.f32.mrb[0].mxu0
  %v791 = vpop.f32.mrb[0].mxu0
  %v792 = vadd.f32 %v591, %v791
  %v793 = vpop.f32.mrb[0].mxu0
  %794 = vmatprep.mubr.bf16.mxu0 0
  %795 = vmatmul.mubr.bf16.gmra.mrb[0].mxu0 %v655
  %v796 = vpop.f32.mrb[0].mxu0
  %v797 = vadd.f32 %v591, %v796
  %v798 = vpop.f32.mrb[0].mxu0
  %v799 = vpop.f32.mrb[0].mxu0
  %v800 = vadd.f32 %v591, %v799
  %v801 = vpop.f32.mrb[0].mxu0
  %802 = vmatprep.mubr.bf16.mxu0 0
  %803 = vmatmul.mubr.bf16.gmra.mrb[0].mxu0 %v658
  %v804 = vpop.f32.mrb[0].mxu0
  %v805 = vadd.f32 %v591, %v804
  %v806 = vpop.f32.mrb[0].mxu0
  %v807 = vpop.f32.mrb[0].mxu0
  %v808 = vadd.f32 %v591, %v807
  %v809 = vpop.f32.mrb[0].mxu0
  %810 = vmatprep.mubr.bf16.mxu0 0
  %811 = vmatmul.mubr.bf16.gmra.mrb[0].mxu0 %v661
  %v812 = vpop.f32.mrb[0].mxu0
  %v813 = vadd.f32 %v591, %v812
  %v814 = vpop.f32.mrb[0].mxu0
  %v815 = vpop.f32.mrb[0].mxu0
  %v816 = vadd.f32 %v591, %v815
  %v817 = vpop.f32.mrb[0].mxu0
  %818 = vmatprep.mubr.bf16.mxu0 0
  %819 = vmatmul.mubr.bf16.gmra.mrb[0].mxu0 %v664
  %v820 = vpop.f32.mrb[0].mxu0
  %v821 = vadd.f32 %v591, %v820
  %v822 = vpop.f32.mrb[0].mxu0
  %v823 = vpop.f32.mrb[0].mxu0
  %v824 = vadd.f32 %v591, %v823
  %v825 = vpop.f32.mrb[0].mxu0
  %826 = vdwg.mxu0
  %v827 = vmax.f32 %v701, 0.0
  %v828 = vmax.f32 %v704, 0.0
  %v829 = vmax.f32 %v709, 0.0
  %v830 = vmax.f32 %v712, 0.0
  %v831 = vmax.f32 %v717, 0.0
  %v832 = vmax.f32 %v720, 0.0
  %v833 = vmax.f32 %v725, 0.0
  %v834 = vmax.f32 %v728, 0.0
  %v835 = vmax.f32 %v733, 0.0
  %v836 = vmax.f32 %v736, 0.0
  %v837 = vmax.f32 %v741, 0.0
  %v838 = vmax.f32 %v744, 0.0
  %v839 = vmax.f32 %v749, 0.0
  %v840 = vmax.f32 %v752, 0.0
  %v841 = vmax.f32 %v757, 0.0
  %v842 = vmax.f32 %v760, 0.0
  %v843 = vmax.f32 %v765, 0.0
  %v844 = vmax.f32 %v768, 0.0
  %v845 = vmax.f32 %v773, 0.0
  %v846 = vmax.f32 %v776, 0.0
  %v847 = vmax.f32 %v781, 0.0
  %v848 = vmax.f32 %v784, 0.0
  %v849 = vmax.f32 %v789, 0.0
  %v850 = vmax.f32 %v792, 0.0
  %v851 = vmax.f32 %v797, 0.0
  %v852 = vmax.f32 %v800, 0.0
  %v853 = vmax.f32 %v805, 0.0
  %v854 = vmax.f32 %v808, 0.0
  %v855 = vmax.f32 %v813, 0.0
  %v856 = vmax.f32 %v816, 0.0
  %v857 = vmax.f32 %v821, 0.0
  %v858 = vmax.f32 %v824, 0.0
  %v859 = vpack.c.bf16 %v828, %v827
  %v860 = vpack.c.bf16 %v830, %v829
  %v861 = vpack.c.bf16 %v832, %v831
  %v862 = vpack.c.bf16 %v834, %v833
  %v863 = vpack.c.bf16 %v836, %v835
  %v864 = vpack.c.bf16 %v838, %v837
  %v865 = vpack.c.bf16 %v840, %v839
  %v866 = vpack.c.bf16 %v842, %v841
  %v867 = vpack.c.bf16 %v844, %v843
  %v868 = vpack.c.bf16 %v846, %v845
  %v869 = vpack.c.bf16 %v848, %v847
  %v870 = vpack.c.bf16 %v850, %v849
  %v871 = vpack.c.bf16 %v852, %v851
  %v872 = vpack.c.bf16 %v854, %v853
  %v873 = vpack.c.bf16 %v856, %v855
  %v874 = vpack.c.bf16 %v858, %v857
  %v875 = vld [vmem:[%s6] sm:$0xf]
  %v876 = vld [vmem:[%s6 + $0x4] sm:$0xf]
  %v877 = vld [vmem:[%s6 + $0x8] sm:$0xf]
  %v878 = vld [vmem:[%s6 + $0xc] sm:$0xf]
  %v879 = vld [vmem:[%s6 + $0x10] sm:$0xf]
  %v880 = vld [vmem:[%s6 + $0x14] sm:$0xf]
  %v881 = vld [vmem:[%s6 + $0x18] sm:$0xf]
  %v882 = vld [vmem:[%s6 + $0x1c] sm:$0xf]
  %v883 = vld [vmem:[%s6 + $0x20] sm:$0xf]
  %v884 = vld [vmem:[%s6 + $0x24] sm:$0xf]
  %v885 = vld [vmem:[%s6 + $0x28] sm:$0xf]
  %v886 = vld [vmem:[%s6 + $0x2c] sm:$0xf]
  %v887 = vld [vmem:[%s6 + $0x30] sm:$0xf]
  %v888 = vld [vmem:[%s6 + $0x34] sm:$0xf]
  %v889 = vld [vmem:[%s6 + $0x38] sm:$0xf]
  %v890 = vld [vmem:[%s6 + $0x3c] sm:$0xf]
  %v891 = vld [vmem:[%s7] sm:$0x1]
  %v893 = vlaneseq
  %v894 = vshrl.u32 %v893, 7
  %v895 = vsub.s32 0, %v894
  %v896 = vrot.slane %v891, %v895
  %v914 = vunpack.c.l.b16 %v875
  %v915 = vunpack.c.l.b16 %v876
  %v916 = vunpack.c.l.b16 %v877
  %v917 = vunpack.c.l.b16 %v878
  %v918 = vunpack.c.l.b16 %v879
  %v919 = vunpack.c.l.b16 %v880
  %v920 = vunpack.c.l.b16 %v881
  %v921 = vunpack.c.l.b16 %v882
  %v922 = vunpack.c.l.b16 %v883
  %v923 = vunpack.c.l.b16 %v884
  %v924 = vunpack.c.l.b16 %v885
  %v925 = vunpack.c.l.b16 %v886
  %v926 = vunpack.c.l.b16 %v887
  %v927 = vunpack.c.l.b16 %v888
  %v928 = vunpack.c.l.b16 %v889
  %v929 = vunpack.c.l.b16 %v890
  %v930 = vpack.c.b16 %v915, %v914
  %v931 = vpack.c.b16 %v917, %v916
  %v932 = vpack.c.b16 %v919, %v918
  %v933 = vpack.c.b16 %v921, %v920
  %v934 = vpack.c.b16 %v923, %v922
  %v935 = vpack.c.b16 %v925, %v924
  %v936 = vpack.c.b16 %v927, %v926
  %v937 = vpack.c.b16 %v929, %v928
  %946 = vmatprep.subr.bf16.mxu0 0
  %947 = vmatpush1.bf16.msra.mxu0 %v930
  %948 = vmatprep.subr.bf16.mxu0 0
  %949 = vmatpush1.bf16.msra.mxu0 %v931
  %950 = vmatprep.subr.bf16.mxu0 0
  %951 = vmatpush1.bf16.msra.mxu0 %v932
  %952 = vmatprep.subr.bf16.mxu0 0
  %953 = vmatpush1.bf16.msra.mxu0 %v933
  %954 = vmatprep.subr.bf16.mxu0 0
  %955 = vmatpush1.bf16.msra.mxu0 %v934
  %956 = vmatprep.subr.bf16.mxu0 0
  %957 = vmatpush1.bf16.msra.mxu0 %v935
  %958 = vmatprep.subr.bf16.mxu0 0
  %959 = vmatpush1.bf16.msra.mxu0 %v936
  %960 = vmatprep.subr.bf16.mxu0 0
  %961 = vmatpush1.bf16.msra.mxu0 %v937
  %962 = vmatprep.subr.bf16.mxu0 0
  %963 = vmatpush1.bf16.msra.mxu0 0
  %964 = vmatprep.subr.bf16.mxu0 0
  %965 = vmatpush1.bf16.msra.mxu0 0
  %966 = vmatprep.subr.bf16.mxu0 0
  %967 = vmatpush1.bf16.msra.mxu0 0
  %968 = vmatprep.subr.bf16.mxu0 0
  %969 = vmatpush1.bf16.msra.mxu0 0
  %970 = vmatprep.subr.bf16.mxu0 0
  %971 = vmatpush1.bf16.msra.mxu0 0
  %972 = vmatprep.subr.bf16.mxu0 0
  %973 = vmatpush1.bf16.msra.mxu0 0
  %974 = vmatprep.subr.bf16.mxu0 0
  %975 = vmatpush1.bf16.msra.mxu0 0
  %976 = vmatprep.subr.bf16.mxu0 0
  %977 = vmatpush1.bf16.msra.mxu0 0
  %978 = vmatprep.mubr.bf16.mxu0 0
  %979 = vmatmul.mubr.bf16.gmra.mrb[0].mxu0 %v859
  %v980 = vpop.f32.mrb[0].mxu0
  %v981 = vadd.f32 %v896, %v980
  %v982 = vpop.f32.mrb[0].mxu0
  %v983 = vpop.f32.mrb[0].mxu0
  %v984 = vadd.f32 %v896, %v983
  %v985 = vpop.f32.mrb[0].mxu0
  %986 = vmatprep.mubr.bf16.mxu0 0
  %987 = vmatmul.mubr.bf16.gmra.mrb[0].mxu0 %v860
  %v988 = vpop.f32.mrb[0].mxu0
  %v989 = vadd.f32 %v896, %v988
  %v990 = vpop.f32.mrb[0].mxu0
  %v991 = vpop.f32.mrb[0].mxu0
  %v992 = vadd.f32 %v896, %v991
  %v993 = vpop.f32.mrb[0].mxu0
  %994 = vmatprep.mubr.bf16.mxu0 0
  %995 = vmatmul.mubr.bf16.gmra.mrb[0].mxu0 %v861
  %v996 = vpop.f32.mrb[0].mxu0
  %v997 = vadd.f32 %v896, %v996
  %v998 = vpop.f32.mrb[0].mxu0
  %v999 = vpop.f32.mrb[0].mxu0
  %v1000 = vadd.f32 %v896, %v999
  %v1001 = vpop.f32.mrb[0].mxu0
  %1002 = vmatprep.mubr.bf16.mxu0 0
  %1003 = vmatmul.mubr.bf16.gmra.mrb[0].mxu0 %v862
  %v1004 = vpop.f32.mrb[0].mxu0
  %v1005 = vadd.f32 %v896, %v1004
  %v1006 = vpop.f32.mrb[0].mxu0
  %v1007 = vpop.f32.mrb[0].mxu0
  %v1008 = vadd.f32 %v896, %v1007
  %v1009 = vpop.f32.mrb[0].mxu0
  %1010 = vmatprep.mubr.bf16.mxu0 0
  %1011 = vmatmul.mubr.bf16.gmra.mrb[0].mxu0 %v863
  %v1012 = vpop.f32.mrb[0].mxu0
  %v1013 = vadd.f32 %v896, %v1012
  %v1014 = vpop.f32.mrb[0].mxu0
  %v1015 = vpop.f32.mrb[0].mxu0
  %v1016 = vadd.f32 %v896, %v1015
  %v1017 = vpop.f32.mrb[0].mxu0
  %1018 = vmatprep.mubr.bf16.mxu0 0
  %1019 = vmatmul.mubr.bf16.gmra.mrb[0].mxu0 %v864
  %v1020 = vpop.f32.mrb[0].mxu0
  %v1021 = vadd.f32 %v896, %v1020
  %v1022 = vpop.f32.mrb[0].mxu0
  %v1023 = vpop.f32.mrb[0].mxu0
  %v1024 = vadd.f32 %v896, %v1023
  %v1025 = vpop.f32.mrb[0].mxu0
  %1026 = vmatprep.mubr.bf16.mxu0 0
  %1027 = vmatmul.mubr.bf16.gmra.mrb[0].mxu0 %v865
  %v1028 = vpop.f32.mrb[0].mxu0
  %v1029 = vadd.f32 %v896, %v1028
  %v1030 = vpop.f32.mrb[0].mxu0
  %v1031 = vpop.f32.mrb[0].mxu0
  %v1032 = vadd.f32 %v896, %v1031
  %v1033 = vpop.f32.mrb[0].mxu0
  %1034 = vmatprep.mubr.bf16.mxu0 0
  %1035 = vmatmul.mubr.bf16.gmra.mrb[0].mxu0 %v866
  %v1036 = vpop.f32.mrb[0].mxu0
  %v1037 = vadd.f32 %v896, %v1036
  %v1038 = vpop.f32.mrb[0].mxu0
  %v1039 = vpop.f32.mrb[0].mxu0
  %v1040 = vadd.f32 %v896, %v1039
  %v1041 = vpop.f32.mrb[0].mxu0
  %1042 = vmatprep.mubr.bf16.mxu0 0
  %1043 = vmatmul.mubr.bf16.gmra.mrb[0].mxu0 %v867
  %v1044 = vpop.f32.mrb[0].mxu0
  %v1045 = vadd.f32 %v896, %v1044
  %v1046 = vpop.f32.mrb[0].mxu0
  %v1047 = vpop.f32.mrb[0].mxu0
  %v1048 = vadd.f32 %v896, %v1047
  %v1049 = vpop.f32.mrb[0].mxu0
  %1050 = vmatprep.mubr.bf16.mxu0 0
  %1051 = vmatmul.mubr.bf16.gmra.mrb[0].mxu0 %v868
  %v1052 = vpop.f32.mrb[0].mxu0
  %v1053 = vadd.f32 %v896, %v1052
  %v1054 = vpop.f32.mrb[0].mxu0
  %v1055 = vpop.f32.mrb[0].mxu0
  %v1056 = vadd.f32 %v896, %v1055
  %v1057 = vpop.f32.mrb[0].mxu0
  %1058 = vmatprep.mubr.bf16.mxu0 0
  %1059 = vmatmul.mubr.bf16.gmra.mrb[0].mxu0 %v869
  %v1060 = vpop.f32.mrb[0].mxu0
  %v1061 = vadd.f32 %v896, %v1060
  %v1062 = vpop.f32.mrb[0].mxu0
  %v1063 = vpop.f32.mrb[0].mxu0
  %v1064 = vadd.f32 %v896, %v1063
  %v1065 = vpop.f32.mrb[0].mxu0
  %1066 = vmatprep.mubr.bf16.mxu0 0
  %1067 = vmatmul.mubr.bf16.gmra.mrb[0].mxu0 %v870
  %v1068 = vpop.f32.mrb[0].mxu0
  %v1069 = vadd.f32 %v896, %v1068
  %v1070 = vpop.f32.mrb[0].mxu0
  %v1071 = vpop.f32.mrb[0].mxu0
  %v1072 = vadd.f32 %v896, %v1071
  %v1073 = vpop.f32.mrb[0].mxu0
  %1074 = vmatprep.mubr.bf16.mxu0 0
  %1075 = vmatmul.mubr.bf16.gmra.mrb[0].mxu0 %v871
  %v1076 = vpop.f32.mrb[0].mxu0
  %v1077 = vadd.f32 %v896, %v1076
  %v1078 = vpop.f32.mrb[0].mxu0
  %v1079 = vpop.f32.mrb[0].mxu0
  %v1080 = vadd.f32 %v896, %v1079
  %v1081 = vpop.f32.mrb[0].mxu0
  %1082 = vmatprep.mubr.bf16.mxu0 0
  %1083 = vmatmul.mubr.bf16.gmra.mrb[0].mxu0 %v872
  %v1084 = vpop.f32.mrb[0].mxu0
  %v1085 = vadd.f32 %v896, %v1084
  %v1086 = vpop.f32.mrb[0].mxu0
  %v1087 = vpop.f32.mrb[0].mxu0
  %v1088 = vadd.f32 %v896, %v1087
  %v1089 = vpop.f32.mrb[0].mxu0
  %1090 = vmatprep.mubr.bf16.mxu0 0
  %1091 = vmatmul.mubr.bf16.gmra.mrb[0].mxu0 %v873
  %v1092 = vpop.f32.mrb[0].mxu0
  %v1093 = vadd.f32 %v896, %v1092
  %v1094 = vpop.f32.mrb[0].mxu0
  %v1095 = vpop.f32.mrb[0].mxu0
  %v1096 = vadd.f32 %v896, %v1095
  %v1097 = vpop.f32.mrb[0].mxu0
  %1098 = vmatprep.mubr.bf16.mxu0 0
  %1099 = vmatmul.mubr.bf16.gmra.mrb[0].mxu0 %v874
  %v1100 = vpop.f32.mrb[0].mxu0
  %v1101 = vadd.f32 %v896, %v1100
  %v1102 = vpop.f32.mrb[0].mxu0
  %v1103 = vpop.f32.mrb[0].mxu0
  %v1104 = vadd.f32 %v896, %v1103
  %v1105 = vpop.f32.mrb[0].mxu0
  %1106 = vdwg.mxu0
  %v1107 = vmax.f32 %v981, 0.0
  %v1108 = vmax.f32 %v984, 0.0
  %v1109 = vmax.f32 %v989, 0.0
  %v1110 = vmax.f32 %v992, 0.0
  %v1111 = vmax.f32 %v997, 0.0
  %v1112 = vmax.f32 %v1000, 0.0
  %v1113 = vmax.f32 %v1005, 0.0
  %v1114 = vmax.f32 %v1008, 0.0
  %v1115 = vmax.f32 %v1013, 0.0
  %v1116 = vmax.f32 %v1016, 0.0
  %v1117 = vmax.f32 %v1021, 0.0
  %v1118 = vmax.f32 %v1024, 0.0
  %v1119 = vmax.f32 %v1029, 0.0
  %v1120 = vmax.f32 %v1032, 0.0
  %v1121 = vmax.f32 %v1037, 0.0
  %v1122 = vmax.f32 %v1040, 0.0
  %v1123 = vmax.f32 %v1045, 0.0
  %v1124 = vmax.f32 %v1048, 0.0
  %v1125 = vmax.f32 %v1053, 0.0
  %v1126 = vmax.f32 %v1056, 0.0
  %v1127 = vmax.f32 %v1061, 0.0
  %v1128 = vmax.f32 %v1064, 0.0
  %v1129 = vmax.f32 %v1069, 0.0
  %v1130 = vmax.f32 %v1072, 0.0
  %v1131 = vmax.f32 %v1077, 0.0
  %v1132 = vmax.f32 %v1080, 0.0
  %v1133 = vmax.f32 %v1085, 0.0
  %v1134 = vmax.f32 %v1088, 0.0
  %v1135 = vmax.f32 %v1093, 0.0
  %v1136 = vmax.f32 %v1096, 0.0
  %v1137 = vmax.f32 %v1101, 0.0
  %v1138 = vmax.f32 %v1104, 0.0
  %v1139 = vpack.c.bf16 %v1108, %v1107
  %v1140 = vpack.c.bf16 %v1110, %v1109
  %v1141 = vpack.c.bf16 %v1112, %v1111
  %v1142 = vpack.c.bf16 %v1114, %v1113
  %v1143 = vpack.c.bf16 %v1116, %v1115
  %v1144 = vpack.c.bf16 %v1118, %v1117
  %v1145 = vpack.c.bf16 %v1120, %v1119
  %v1146 = vpack.c.bf16 %v1122, %v1121
  %v1147 = vpack.c.bf16 %v1124, %v1123
  %v1148 = vpack.c.bf16 %v1126, %v1125
  %v1149 = vpack.c.bf16 %v1128, %v1127
  %v1150 = vpack.c.bf16 %v1130, %v1129
  %v1151 = vpack.c.bf16 %v1132, %v1131
  %v1152 = vpack.c.bf16 %v1134, %v1133
  %v1153 = vpack.c.bf16 %v1136, %v1135
  %v1154 = vpack.c.bf16 %v1138, %v1137
  %v1155 = vld [vmem:[%s8] sm:$0xf]
  %v1156 = vld [vmem:[%s8 + $0x4] sm:$0xf]
  %v1157 = vld [vmem:[%s8 + $0x8] sm:$0xf]
  %v1158 = vld [vmem:[%s8 + $0xc] sm:$0xf]
  %v1159 = vld [vmem:[%s8 + $0x10] sm:$0xf]
  %v1160 = vld [vmem:[%s8 + $0x14] sm:$0xf]
  %v1161 = vld [vmem:[%s8 + $0x18] sm:$0xf]
  %v1162 = vld [vmem:[%s8 + $0x1c] sm:$0xf]
  %v1163 = vld [vmem:[%s8 + $0x20] sm:$0xf]
  %v1164 = vld [vmem:[%s8 + $0x24] sm:$0xf]
  %v1165 = vld [vmem:[%s8 + $0x28] sm:$0xf]
  %v1166 = vld [vmem:[%s8 + $0x2c] sm:$0xf]
  %v1167 = vld [vmem:[%s8 + $0x30] sm:$0xf]
  %v1168 = vld [vmem:[%s8 + $0x34] sm:$0xf]
  %v1169 = vld [vmem:[%s8 + $0x38] sm:$0xf]
  %v1170 = vld [vmem:[%s8 + $0x3c] sm:$0xf]
  %v1171 = vld [vmem:[%s9] sm:$0x1]
  %v1173 = vlaneseq
  %v1174 = vshrl.u32 %v1173, 7
  %v1175 = vsub.s32 0, %v1174
  %v1176 = vrot.slane %v1171, %v1175
  %v1194 = vunpack.c.l.b16 %v1155
  %v1195 = vunpack.c.l.b16 %v1156
  %v1196 = vunpack.c.l.b16 %v1157
  %v1197 = vunpack.c.l.b16 %v1158
  %v1198 = vunpack.c.l.b16 %v1159
  %v1199 = vunpack.c.l.b16 %v1160
  %v1200 = vunpack.c.l.b16 %v1161
  %v1201 = vunpack.c.l.b16 %v1162
  %v1202 = vunpack.c.l.b16 %v1163
  %v1203 = vunpack.c.l.b16 %v1164
  %v1204 = vunpack.c.l.b16 %v1165
  %v1205 = vunpack.c.l.b16 %v1166
  %v1206 = vunpack.c.l.b16 %v1167
  %v1207 = vunpack.c.l.b16 %v1168
  %v1208 = vunpack.c.l.b16 %v1169
  %v1209 = vunpack.c.l.b16 %v1170
  %v1210 = vpack.c.b16 %v1195, %v1194
  %v1211 = vpack.c.b16 %v1197, %v1196
  %v1212 = vpack.c.b16 %v1199, %v1198
  %v1213 = vpack.c.b16 %v1201, %v1200
  %v1214 = vpack.c.b16 %v1203, %v1202
  %v1215 = vpack.c.b16 %v1205, %v1204
  %v1216 = vpack.c.b16 %v1207, %v1206
  %v1217 = vpack.c.b16 %v1209, %v1208
  %1226 = vmatprep.subr.bf16.mxu0 0
  %1227 = vmatpush1.bf16.msra.mxu0 %v1210
  %1228 = vmatprep.subr.bf16.mxu0 0
  %1229 = vmatpush1.bf16.msra.mxu0 %v1211
  %1230 = vmatprep.subr.bf16.mxu0 0
  %1231 = vmatpush1.bf16.msra.mxu0 %v1212
  %1232 = vmatprep.subr.bf16.mxu0 0
  %1233 = vmatpush1.bf16.msra.mxu0 %v1213
  %1234 = vmatprep.subr.bf16.mxu0 0
  %1235 = vmatpush1.bf16.msra.mxu0 %v1214
  %1236 = vmatprep.subr.bf16.mxu0 0
  %1237 = vmatpush1.bf16.msra.mxu0 %v1215
  %1238 = vmatprep.subr.bf16.mxu0 0
  %1239 = vmatpush1.bf16.msra.mxu0 %v1216
  %1240 = vmatprep.subr.bf16.mxu0 0
  %1241 = vmatpush1.bf16.msra.mxu0 %v1217
  %1242 = vmatprep.subr.bf16.mxu0 0
  %1243 = vmatpush1.bf16.msra.mxu0 0
  %1244 = vmatprep.subr.bf16.mxu0 0
  %1245 = vmatpush1.bf16.msra.mxu0 0
  %1246 = vmatprep.subr.bf16.mxu0 0
  %1247 = vmatpush1.bf16.msra.mxu0 0
  %1248 = vmatprep.subr.bf16.mxu0 0
  %1249 = vmatpush1.bf16.msra.mxu0 0
  %1250 = vmatprep.subr.bf16.mxu0 0
  %1251 = vmatpush1.bf16.msra.mxu0 0
  %1252 = vmatprep.subr.bf16.mxu0 0
  %1253 = vmatpush1.bf16.msra.mxu0 0
  %1254 = vmatprep.subr.bf16.mxu0 0
  %1255 = vmatpush1.bf16.msra.mxu0 0
  %1256 = vmatprep.subr.bf16.mxu0 0
  %1257 = vmatpush1.bf16.msra.mxu0 0
  %1258 = vmatprep.mubr.bf16.mxu0 0
  %1259 = vmatmul.mubr.bf16.gmra.mrb[0].mxu0 %v1139
  %v1260 = vpop.f32.mrb[0].mxu0
  %v1261 = vadd.f32 %v1176, %v1260
  %v1262 = vpop.f32.mrb[0].mxu0
  %v1263 = vpop.f32.mrb[0].mxu0
  %v1264 = vadd.f32 %v1176, %v1263
  %v1265 = vpop.f32.mrb[0].mxu0
  %1266 = vmatprep.mubr.bf16.mxu0 0
  %1267 = vmatmul.mubr.bf16.gmra.mrb[0].mxu0 %v1140
  %v1268 = vpop.f32.mrb[0].mxu0
  %v1269 = vadd.f32 %v1176, %v1268
  %v1270 = vpop.f32.mrb[0].mxu0
  %v1271 = vpop.f32.mrb[0].mxu0
  %v1272 = vadd.f32 %v1176, %v1271
  %v1273 = vpop.f32.mrb[0].mxu0
  %1274 = vmatprep.mubr.bf16.mxu0 0
  %1275 = vmatmul.mubr.bf16.gmra.mrb[0].mxu0 %v1141
  %v1276 = vpop.f32.mrb[0].mxu0
  %v1277 = vadd.f32 %v1176, %v1276
  %v1278 = vpop.f32.mrb[0].mxu0
  %v1279 = vpop.f32.mrb[0].mxu0
  %v1280 = vadd.f32 %v1176, %v1279
  %v1281 = vpop.f32.mrb[0].mxu0
  %1282 = vmatprep.mubr.bf16.mxu0 0
  %1283 = vmatmul.mubr.bf16.gmra.mrb[0].mxu0 %v1142
  %v1284 = vpop.f32.mrb[0].mxu0
  %v1285 = vadd.f32 %v1176, %v1284
  %v1286 = vpop.f32.mrb[0].mxu0
  %v1287 = vpop.f32.mrb[0].mxu0
  %v1288 = vadd.f32 %v1176, %v1287
  %v1289 = vpop.f32.mrb[0].mxu0
  %1290 = vmatprep.mubr.bf16.mxu0 0
  %1291 = vmatmul.mubr.bf16.gmra.mrb[0].mxu0 %v1143
  %v1292 = vpop.f32.mrb[0].mxu0
  %v1293 = vadd.f32 %v1176, %v1292
  %v1294 = vpop.f32.mrb[0].mxu0
  %v1295 = vpop.f32.mrb[0].mxu0
  %v1296 = vadd.f32 %v1176, %v1295
  %v1297 = vpop.f32.mrb[0].mxu0
  %1298 = vmatprep.mubr.bf16.mxu0 0
  %1299 = vmatmul.mubr.bf16.gmra.mrb[0].mxu0 %v1144
  %v1300 = vpop.f32.mrb[0].mxu0
  %v1301 = vadd.f32 %v1176, %v1300
  %v1302 = vpop.f32.mrb[0].mxu0
  %v1303 = vpop.f32.mrb[0].mxu0
  %v1304 = vadd.f32 %v1176, %v1303
  %v1305 = vpop.f32.mrb[0].mxu0
  %1306 = vmatprep.mubr.bf16.mxu0 0
  %1307 = vmatmul.mubr.bf16.gmra.mrb[0].mxu0 %v1145
  %v1308 = vpop.f32.mrb[0].mxu0
  %v1309 = vadd.f32 %v1176, %v1308
  %v1310 = vpop.f32.mrb[0].mxu0
  %v1311 = vpop.f32.mrb[0].mxu0
  %v1312 = vadd.f32 %v1176, %v1311
  %v1313 = vpop.f32.mrb[0].mxu0
  %1314 = vmatprep.mubr.bf16.mxu0 0
  %1315 = vmatmul.mubr.bf16.gmra.mrb[0].mxu0 %v1146
  %v1316 = vpop.f32.mrb[0].mxu0
  %v1317 = vadd.f32 %v1176, %v1316
  %v1318 = vpop.f32.mrb[0].mxu0
  %v1319 = vpop.f32.mrb[0].mxu0
  %v1320 = vadd.f32 %v1176, %v1319
  %v1321 = vpop.f32.mrb[0].mxu0
  %1322 = vmatprep.mubr.bf16.mxu0 0
  %1323 = vmatmul.mubr.bf16.gmra.mrb[0].mxu0 %v1147
  %v1324 = vpop.f32.mrb[0].mxu0
  %v1325 = vadd.f32 %v1176, %v1324
  %v1326 = vpop.f32.mrb[0].mxu0
  %v1327 = vpop.f32.mrb[0].mxu0
  %v1328 = vadd.f32 %v1176, %v1327
  %v1329 = vpop.f32.mrb[0].mxu0
  %1330 = vmatprep.mubr.bf16.mxu0 0
  %1331 = vmatmul.mubr.bf16.gmra.mrb[0].mxu0 %v1148
  %v1332 = vpop.f32.mrb[0].mxu0
  %v1333 = vadd.f32 %v1176, %v1332
  %v1334 = vpop.f32.mrb[0].mxu0
  %v1335 = vpop.f32.mrb[0].mxu0
  %v1336 = vadd.f32 %v1176, %v1335
  %v1337 = vpop.f32.mrb[0].mxu0
  %1338 = vmatprep.mubr.bf16.mxu0 0
  %1339 = vmatmul.mubr.bf16.gmra.mrb[0].mxu0 %v1149
  %v1340 = vpop.f32.mrb[0].mxu0
  %v1341 = vadd.f32 %v1176, %v1340
  %v1342 = vpop.f32.mrb[0].mxu0
  %v1343 = vpop.f32.mrb[0].mxu0
  %v1344 = vadd.f32 %v1176, %v1343
  %v1345 = vpop.f32.mrb[0].mxu0
  %1346 = vmatprep.mubr.bf16.mxu0 0
  %1347 = vmatmul.mubr.bf16.gmra.mrb[0].mxu0 %v1150
  %v1348 = vpop.f32.mrb[0].mxu0
  %v1349 = vadd.f32 %v1176, %v1348
  %v1350 = vpop.f32.mrb[0].mxu0
  %v1351 = vpop.f32.mrb[0].mxu0
  %v1352 = vadd.f32 %v1176, %v1351
  %v1353 = vpop.f32.mrb[0].mxu0
  %1354 = vmatprep.mubr.bf16.mxu0 0
  %1355 = vmatmul.mubr.bf16.gmra.mrb[0].mxu0 %v1151
  %v1356 = vpop.f32.mrb[0].mxu0
  %v1357 = vadd.f32 %v1176, %v1356
  %v1358 = vpop.f32.mrb[0].mxu0
  %v1359 = vpop.f32.mrb[0].mxu0
  %v1360 = vadd.f32 %v1176, %v1359
  %v1361 = vpop.f32.mrb[0].mxu0
  %1362 = vmatprep.mubr.bf16.mxu0 0
  %1363 = vmatmul.mubr.bf16.gmra.mrb[0].mxu0 %v1152
  %v1364 = vpop.f32.mrb[0].mxu0
  %v1365 = vadd.f32 %v1176, %v1364
  %v1366 = vpop.f32.mrb[0].mxu0
  %v1367 = vpop.f32.mrb[0].mxu0
  %v1368 = vadd.f32 %v1176, %v1367
  %v1369 = vpop.f32.mrb[0].mxu0
  %1370 = vmatprep.mubr.bf16.mxu0 0
  %1371 = vmatmul.mubr.bf16.gmra.mrb[0].mxu0 %v1153
  %v1372 = vpop.f32.mrb[0].mxu0
  %v1373 = vadd.f32 %v1176, %v1372
  %v1374 = vpop.f32.mrb[0].mxu0
  %v1375 = vpop.f32.mrb[0].mxu0
  %v1376 = vadd.f32 %v1176, %v1375
  %v1377 = vpop.f32.mrb[0].mxu0
  %1378 = vmatprep.mubr.bf16.mxu0 0
  %1379 = vmatmul.mubr.bf16.gmra.mrb[0].mxu0 %v1154
  %v1380 = vpop.f32.mrb[0].mxu0
  %v1381 = vadd.f32 %v1176, %v1380
  %v1382 = vpop.f32.mrb[0].mxu0
  %v1383 = vpop.f32.mrb[0].mxu0
  %v1384 = vadd.f32 %v1176, %v1383
  %v1385 = vpop.f32.mrb[0].mxu0
  %1386 = vdwg.mxu0
  %v1387 = vmax.f32 %v1261, 0.0
  %v1388 = vmax.f32 %v1264, 0.0
  %v1389 = vmax.f32 %v1269, 0.0
  %v1390 = vmax.f32 %v1272, 0.0
  %v1391 = vmax.f32 %v1277, 0.0
  %v1392 = vmax.f32 %v1280, 0.0
  %v1393 = vmax.f32 %v1285, 0.0
  %v1394 = vmax.f32 %v1288, 0.0
  %v1395 = vmax.f32 %v1293, 0.0
  %v1396 = vmax.f32 %v1296, 0.0
  %v1397 = vmax.f32 %v1301, 0.0
  %v1398 = vmax.f32 %v1304, 0.0
  %v1399 = vmax.f32 %v1309, 0.0
  %v1400 = vmax.f32 %v1312, 0.0
  %v1401 = vmax.f32 %v1317, 0.0
  %v1402 = vmax.f32 %v1320, 0.0
  %v1403 = vmax.f32 %v1325, 0.0
  %v1404 = vmax.f32 %v1328, 0.0
  %v1405 = vmax.f32 %v1333, 0.0
  %v1406 = vmax.f32 %v1336, 0.0
  %v1407 = vmax.f32 %v1341, 0.0
  %v1408 = vmax.f32 %v1344, 0.0
  %v1409 = vmax.f32 %v1349, 0.0
  %v1410 = vmax.f32 %v1352, 0.0
  %v1411 = vmax.f32 %v1357, 0.0
  %v1412 = vmax.f32 %v1360, 0.0
  %v1413 = vmax.f32 %v1365, 0.0
  %v1414 = vmax.f32 %v1368, 0.0
  %v1415 = vmax.f32 %v1373, 0.0
  %v1416 = vmax.f32 %v1376, 0.0
  %v1417 = vmax.f32 %v1381, 0.0
  %v1418 = vmax.f32 %v1384, 0.0
  %v1419 = vmax.f32 %v1387, %v1403
  %v1420 = vmax.f32 %v1388, %v1404
  %v1421 = vmax.f32 %v1389, %v1405
  %v1422 = vmax.f32 %v1390, %v1406
  %v1423 = vmax.f32 %v1391, %v1407
  %v1424 = vmax.f32 %v1392, %v1408
  %v1425 = vmax.f32 %v1393, %v1409
  %v1426 = vmax.f32 %v1394, %v1410
  %v1427 = vmax.f32 %v1395, %v1411
  %v1428 = vmax.f32 %v1396, %v1412
  %v1429 = vmax.f32 %v1397, %v1413
  %v1430 = vmax.f32 %v1398, %v1414
  %v1431 = vmax.f32 %v1399, %v1415
  %v1432 = vmax.f32 %v1400, %v1416
  %v1433 = vmax.f32 %v1401, %v1417
  %v1434 = vmax.f32 %v1402, %v1418
  %v1435 = vmax.f32 %v1419, %v1427
  %v1436 = vmax.f32 %v1420, %v1428
  %v1437 = vmax.f32 %v1421, %v1429
  %v1438 = vmax.f32 %v1422, %v1430
  %v1439 = vmax.f32 %v1423, %v1431
  %v1440 = vmax.f32 %v1424, %v1432
  %v1441 = vmax.f32 %v1425, %v1433
  %v1442 = vmax.f32 %v1426, %v1434
  %v1443 = vmax.f32 %v1435, %v1439
  %v1444 = vmax.f32 %v1436, %v1440
  %v1445 = vmax.f32 %v1437, %v1441
  %v1446 = vmax.f32 %v1438, %v1442
  %v1447 = vmax.f32 %v1443, %v1445
  %v1448 = vmax.f32 %v1444, %v1446
  %v1449 = vmax.f32 %v1447, %v1448
  %v1450 = vld [vmem:[#allocation2] sm:$0xff]
  %v1451 = vmax.f32 %v1450, %v1449
  %1452 = vst [vmem:[#allocation2] sm:$0xff] %v1451
  // Predicated region
  $region70: #{delta_estimator.1} parent=0 // pred_check
    %p1453 = pneg %p56
  $region71: #{delta_estimator.1} parent=0 // pred_check_branch
    %1455 = sbr.rel (%p1453) target = $region73
  $region72: #{delta_estimator.1} parent=0 // pred_region
    %v1456 = vld [vmem:[#allocation2] sm:$0xff]
    %v1457 = vrot.slane %v1456, 4
    %v1458 = vmax.f32 %v1456, %v1457
    %v1459 = vrot.slane %v1458, 2
    %v1460 = vmax.f32 %v1458, %v1459
    %v1461 = vrot.slane %v1460, 1
    %v1462 = vmax.f32 %v1460, %v1461
    %v1463 = vpack.c.bf16 %v1462, %v1462
    %v1464 = vld [vmem:[%s10] sm:$0xf]
    %v1465 = vld [vmem:[%s10 + $0x4] sm:$0xf]
    %v1466 = vld [vmem:[%s10 + $0x8] sm:$0xf]
    %v1467 = vld [vmem:[%s10 + $0xc] sm:$0xf]
    %v1468 = vld [vmem:[%s10 + $0x10] sm:$0xf]
    %v1469 = vld [vmem:[%s10 + $0x14] sm:$0xf]
    %v1470 = vld [vmem:[%s10 + $0x18] sm:$0xf]
    %v1471 = vld [vmem:[%s10 + $0x1c] sm:$0xf]
    %v1472 = vld [vmem:[%s10 + $0x20] sm:$0xf]
    %v1473 = vld [vmem:[%s10 + $0x24] sm:$0xf]
    %v1474 = vld [vmem:[%s10 + $0x28] sm:$0xf]
    %v1475 = vld [vmem:[%s10 + $0x2c] sm:$0xf]
    %v1476 = vld [vmem:[%s10 + $0x30] sm:$0xf]
    %v1477 = vld [vmem:[%s10 + $0x34] sm:$0xf]
    %v1478 = vld [vmem:[%s10 + $0x38] sm:$0xf]
    %v1479 = vld [vmem:[%s10 + $0x3c] sm:$0xf]
    %v1480 = vld [vmem:[%s11] sm:$0x1]
    %v1497 = vunpack.c.l.b16 %v1464
    %v1498 = vunpack.c.l.b16 %v1465
    %v1499 = vunpack.c.l.b16 %v1466
    %v1500 = vunpack.c.l.b16 %v1467
    %v1501 = vunpack.c.l.b16 %v1468
    %v1502 = vunpack.c.l.b16 %v1469
    %v1503 = vunpack.c.l.b16 %v1470
    %v1504 = vunpack.c.l.b16 %v1471
    %v1505 = vunpack.c.l.b16 %v1472
    %v1506 = vunpack.c.l.b16 %v1473
    %v1507 = vunpack.c.l.b16 %v1474
    %v1508 = vunpack.c.l.b16 %v1475
    %v1509 = vunpack.c.l.b16 %v1476
    %v1510 = vunpack.c.l.b16 %v1477
    %v1511 = vunpack.c.l.b16 %v1478
    %v1512 = vunpack.c.l.b16 %v1479
    %v1513 = vpack.c.b16 %v1498, %v1497
    %v1514 = vpack.c.b16 %v1500, %v1499
    %v1515 = vpack.c.b16 %v1502, %v1501
    %v1516 = vpack.c.b16 %v1504, %v1503
    %v1517 = vpack.c.b16 %v1506, %v1505
    %v1518 = vpack.c.b16 %v1508, %v1507
    %v1519 = vpack.c.b16 %v1510, %v1509
    %v1520 = vpack.c.b16 %v1512, %v1511
    %1529 = vmatprep.subr.bf16.mxu0 0
    %1530 = vmatpush1.bf16.msra.mxu0 %v1513
    %1531 = vmatprep.subr.bf16.mxu0 0
    %1532 = vmatpush1.bf16.msra.mxu0 %v1514
    %1533 = vmatprep.subr.bf16.mxu0 0
    %1534 = vmatpush1.bf16.msra.mxu0 %v1515
    %1535 = vmatprep.subr.bf16.mxu0 0
    %1536 = vmatpush1.bf16.msra.mxu0 %v1516
    %1537 = vmatprep.subr.bf16.mxu0 0
    %1538 = vmatpush1.bf16.msra.mxu0 %v1517
    %1539 = vmatprep.subr.bf16.mxu0 0
    %1540 = vmatpush1.bf16.msra.mxu0 %v1518
    %1541 = vmatprep.subr.bf16.mxu0 0
    %1542 = vmatpush1.bf16.msra.mxu0 %v1519
    %1543 = vmatprep.subr.bf16.mxu0 0
    %1544 = vmatpush1.bf16.msra.mxu0 %v1520
    %1545 = vmatprep.subr.bf16.mxu0 0
    %1546 = vmatpush1.bf16.msra.mxu0 0
    %1547 = vmatprep.subr.bf16.mxu0 0
    %1548 = vmatpush1.bf16.msra.mxu0 0
    %1549 = vmatprep.subr.bf16.mxu0 0
    %1550 = vmatpush1.bf16.msra.mxu0 0
    %1551 = vmatprep.subr.bf16.mxu0 0
    %1552 = vmatpush1.bf16.msra.mxu0 0
    %1553 = vmatprep.subr.bf16.mxu0 0
    %1554 = vmatpush1.bf16.msra.mxu0 0
    %1555 = vmatprep.subr.bf16.mxu0 0
    %1556 = vmatpush1.bf16.msra.mxu0 0
    %1557 = vmatprep.subr.bf16.mxu0 0
    %1558 = vmatpush1.bf16.msra.mxu0 0
    %1559 = vmatprep.subr.bf16.mxu0 0
    %1560 = vmatpush1.bf16.msra.mxu0 0
    %1561 = vmatprep.mubr.bf16.mxu0 0
    %1562 = vmatmul.mubr.bf16.gmra.mrb[0].mxu0 %v1463
    %v1563 = vpop.f32.mrb[0].mxu0
    %v1564 = vadd.f32 %v1480, %v1563
    %v1565 = vpop.f32.mrb[0].mxu0
    %v1566 = vpop.f32.mrb[0].mxu0
    %v1567 = vpop.f32.mrb[0].mxu0
    %1568 = vdwg.mxu0
    %v1569 = vmax.f32 %v1564, 0.0
    %v1570 = vpack.c.bf16 %v1569, %v1569
    %v1571 = vld [vmem:[%s12] sm:$0xf]
    %v1572 = vld [vmem:[%s12 + $0x4] sm:$0xf]
    %v1573 = vld [vmem:[%s12 + $0x8] sm:$0xf]
    %v1574 = vld [vmem:[%s12 + $0xc] sm:$0xf]
    %v1575 = vld [vmem:[%s12 + $0x10] sm:$0xf]
    %v1576 = vld [vmem:[%s12 + $0x14] sm:$0xf]
    %v1577 = vld [vmem:[%s12 + $0x18] sm:$0xf]
    %v1578 = vld [vmem:[%s12 + $0x1c] sm:$0xf]
    %v1579 = vld [vmem:[%s12 + $0x20] sm:$0xf]
    %v1580 = vld [vmem:[%s12 + $0x24] sm:$0xf]
    %v1581 = vld [vmem:[%s12 + $0x28] sm:$0xf]
    %v1582 = vld [vmem:[%s12 + $0x2c] sm:$0xf]
    %v1583 = vld [vmem:[%s12 + $0x30] sm:$0xf]
    %v1584 = vld [vmem:[%s12 + $0x34] sm:$0xf]
    %v1585 = vld [vmem:[%s12 + $0x38] sm:$0xf]
    %v1586 = vld [vmem:[%s12 + $0x3c] sm:$0xf]
    %v1587 = vld [vmem:[%s13] sm:$0x1]
    %v1604 = vunpack.c.l.b16 %v1571
    %v1605 = vunpack.c.l.b16 %v1572
    %v1606 = vunpack.c.l.b16 %v1573
    %v1607 = vunpack.c.l.b16 %v1574
    %v1608 = vunpack.c.l.b16 %v1575
    %v1609 = vunpack.c.l.b16 %v1576
    %v1610 = vunpack.c.l.b16 %v1577
    %v1611 = vunpack.c.l.b16 %v1578
    %v1612 = vunpack.c.l.b16 %v1579
    %v1613 = vunpack.c.l.b16 %v1580
    %v1614 = vunpack.c.l.b16 %v1581
    %v1615 = vunpack.c.l.b16 %v1582
    %v1616 = vunpack.c.l.b16 %v1583
    %v1617 = vunpack.c.l.b16 %v1584
    %v1618 = vunpack.c.l.b16 %v1585
    %v1619 = vunpack.c.l.b16 %v1586
    %v1620 = vpack.c.b16 %v1605, %v1604
    %v1621 = vpack.c.b16 %v1607, %v1606
    %v1622 = vpack.c.b16 %v1609, %v1608
    %v1623 = vpack.c.b16 %v1611, %v1610
    %v1624 = vpack.c.b16 %v1613, %v1612
    %v1625 = vpack.c.b16 %v1615, %v1614
    %v1626 = vpack.c.b16 %v1617, %v1616
    %v1627 = vpack.c.b16 %v1619, %v1618
    %1636 = vmatprep.subr.bf16.mxu0 0
    %1637 = vmatpush1.bf16.msra.mxu0 %v1620
    %1638 = vmatprep.subr.bf16.mxu0 0
    %1639 = vmatpush1.bf16.msra.mxu0 %v1621
    %1640 = vmatprep.subr.bf16.mxu0 0
    %1641 = vmatpush1.bf16.msra.mxu0 %v1622
    %1642 = vmatprep.subr.bf16.mxu0 0
    %1643 = vmatpush1.bf16.msra.mxu0 %v1623
    %1644 = vmatprep.subr.bf16.mxu0 0
    %1645 = vmatpush1.bf16.msra.mxu0 %v1624
    %1646 = vmatprep.subr.bf16.mxu0 0
    %1647 = vmatpush1.bf16.msra.mxu0 %v1625
    %1648 = vmatprep.subr.bf16.mxu0 0
    %1649 = vmatpush1.bf16.msra.mxu0 %v1626
    %1650 = vmatprep.subr.bf16.mxu0 0
    %1651 = vmatpush1.bf16.msra.mxu0 %v1627
    %1652 = vmatprep.subr.bf16.mxu0 0
    %1653 = vmatpush1.bf16.msra.mxu0 0
    %1654 = vmatprep.subr.bf16.mxu0 0
    %1655 = vmatpush1.bf16.msra.mxu0 0
    %1656 = vmatprep.subr.bf16.mxu0 0
    %1657 = vmatpush1.bf16.msra.mxu0 0
    %1658 = vmatprep.subr.bf16.mxu0 0
    %1659 = vmatpush1.bf16.msra.mxu0 0
    %1660 = vmatprep.subr.bf16.mxu0 0
    %1661 = vmatpush1.bf16.msra.mxu0 0
    %1662 = vmatprep.subr.bf16.mxu0 0
    %1663 = vmatpush1.bf16.msra.mxu0 0
    %1664 = vmatprep.subr.bf16.mxu0 0
    %1665 = vmatpush1.bf16.msra.mxu0 0
    %1666 = vmatprep.subr.bf16.mxu0 0
    %1667 = vmatpush1.bf16.msra.mxu0 0
    %1668 = vmatprep.mubr.bf16.mxu0 0
    %1669 = vmatmul.mubr.bf16.gmra.mrb[0].mxu0 %v1570
    %v1670 = vpop.f32.mrb[0].mxu0
    %v1671 = vadd.f32 %v1587, %v1670
    %v1672 = vpop.f32.mrb[0].mxu0
    %v1673 = vpop.f32.mrb[0].mxu0
    %v1674 = vpop.f32.mrb[0].mxu0
    %1675 = vdwg.mxu0
    %v1676 = vmax.f32 %v1671, 0.0
    %v1677 = vld [vmem:[%s14] sm:$0x1]
    %v1678 = vmul.f32 %v1676, %v1677
    %vm1679 = vcmask 1040384
    %v1680 = vsel %vm1679, %v1678, 0.0
    %1681 = vadd.xlane.f32.xlu0 %v1680
    %v1682 = vpop.xlane.xlu0 %1681
    %v1683 = vld [vmem:[#allocation3] sm:$0x1]
    %v1684 = vadd.f32 %v1682, %v1683
    %s1686 = vtos %v1684
    %v1687 = vstv %s1686
    %v1689 = vxor.u32 %v1687, 2147483648
    %v1690 = vmul.f32 %v1689, 1.442695
    %v1691 = vpow.pop %v1690
    %v1692 = vadd.f32 %v1691, 1.0
    %v1693 = vrcp.pop %v1692
    %v1694 = vmul.f32 1.0, %v1693
    %1695 = vst [vmem:[%s16] sm:$0xff] %v1694
  $region73: #{delta_estimator.1} parent=0 // pred_fallthru
    _
  // Predicated region
  $region74: #{delta_estimator.1} parent=0 // pred_check
    _
  $region75: #{delta_estimator.1} parent=0 // pred_check_branch
    %1697 = sbr.rel (0) target = $region77
  $region76: #{delta_estimator.1} parent=0 // pred_region
    _
  $region77: #{delta_estimator.1} parent=0 // pred_fallthru
    _
  // Predicated region
  $region78: #{delta_estimator.1} parent=0 // pred_check
    _
  $region79: #{delta_estimator.1} parent=0 // pred_check_branch
    %1699 = sbr.rel (0) target = $region81
  $region80: #{delta_estimator.1} parent=0 // pred_region
    _
  $region81: #{delta_estimator.1} parent=0 // pred_fallthru
    _

</llo_original>
